<compile_context>
chip_gen: v7x
topology: tpu7x:2x2x1
jax: 0.10.0
libtpu: 0.0.40
codegen_flags: <defaults>
</compile_context>

<pallas_src>
import jax
import jax.numpy as jnp
from jax import lax
from jax.experimental import pallas as pl
from jax.experimental.pallas import tpu as pltpu

EPS = 1e-5
SLOPE = 0.2  # LeakyReLU negative slope


def encoder_kernel(x_ref, w1t_ref, g1_ref, b1_ref, w2t_ref, g2_ref, b2_ref,
                   out_ref, pad1_ref, pad2_ref):
    N, H0, W0, Cin = x_ref.shape
    H, W = H0 // 2, W0 // 2
    C1 = w1t_ref.shape[0]          # w1t: (C1, 9*Cin)
    C2 = w2t_ref.shape[0]          # w2t: (C2, 9*C1)
    M = N * H * W
    inv_m = 1.0 / M

    # ---------------- MaxPool2d(2, 2): vectorized ----------------
    # pool W with two strided loads, pool H with a leading-split reshape-max.
    xe = x_ref[:, :, pl.ds(0, W, stride=2), :]              # (N, H0, W, Cin)
    xo = x_ref[:, :, pl.ds(1, W, stride=2), :]
    xw = jnp.maximum(xe, xo)
    pooled = jnp.max(xw.reshape(N, H, 2, W, Cin), axis=2)   # (N, H, W, Cin)

    # ---------------- Conv1 input: full-buffer zero + interior store --------------
    pad1_ref[...] = jnp.zeros_like(pad1_ref)
    pad1_ref[:, 1:H + 1, 1:W + 1, :] = pooled

    # ---------------- Conv1: in-register im2col + one transposed MXU matmul -------
    patches1 = jnp.concatenate(
        [pad1_ref[:, ky:ky + H, kx:kx + W, :]
         for ky in range(3) for kx in range(3)],
        axis=-1).reshape(M, 9 * Cin)                         # (M, 9*Cin)
    # (C1, 9*Cin) x (M, 9*Cin)^T -> (C1, M): lane-dense activations.
    acc1 = lax.dot_general(
        w1t_ref[...], patches1,
        dimension_numbers=(((1,), (1,)), ((), ())),
        preferred_element_type=jnp.float32)                  # (C1, M)

    # ---------------- BatchNorm1 (two-pass batch stats) + LeakyReLU(0.2) ----------
    mu1 = jnp.sum(acc1, axis=1, keepdims=True) * inv_m       # (C1, 1)
    d1 = acc1 - mu1
    var1 = jnp.sum(d1 * d1, axis=1, keepdims=True) * inv_m
    y1 = d1 * lax.rsqrt(var1 + EPS) * g1_ref[...] + b1_ref[...]
    y1 = jnp.where(y1 >= 0, y1, SLOPE * y1)                  # (C1, M)

    # ---------------- Conv2 input: back to NHWC, zero halo, interior store --------
    y1_nhwc = jnp.transpose(y1, (1, 0)).reshape(N, H, W, C1)
    pad2_ref[...] = jnp.zeros_like(pad2_ref)
    pad2_ref[:, 1:H + 1, 1:W + 1, :] = y1_nhwc

    # ---------------- Conv2: in-register im2col + one transposed MXU matmul -------
    patches2 = jnp.concatenate(
        [pad2_ref[:, ky:ky + H, kx:kx + W, :]
         for ky in range(3) for kx in range(3)],
        axis=-1).reshape(M, 9 * C1)                          # (M, 9*C1)
    acc2 = lax.dot_general(
        w2t_ref[...], patches2,
        dimension_numbers=(((1,), (1,)), ((), ())),
        preferred_element_type=jnp.float32)                  # (C2, M)

    # ---------------- BatchNorm2 + LeakyReLU(0.2) ----------------------------------
    mu2 = jnp.sum(acc2, axis=1, keepdims=True) * inv_m
    d2 = acc2 - mu2
    var2 = jnp.sum(d2 * d2, axis=1, keepdims=True) * inv_m
    y2 = d2 * lax.rsqrt(var2 + EPS) * g2_ref[...] + b2_ref[...]
    y2 = jnp.where(y2 >= 0, y2, SLOPE * y2)                  # (C2, M)

    # Lane-dense output store: last dim M is a multiple of 128 -> unmasked vst.
    out_ref[...] = y2.astype(out_ref.dtype)


def encoder_forward(x_nchw, params):
    """x_nchw: (N, Cin, H, W) float32; returns (N, Cout, H//2, W//2)."""
    w1, g1, b1, w2, g2, b2 = params  # w*: (3,3,Ci,Co) HWIO; g*/b*: (1, Co)
    N, Cin, H0, W0 = x_nchw.shape
    assert H0 % 2 == 0 and W0 % 2 == 0, "MaxPool2d(2) requires even H/W"
    H, W = H0 // 2, W0 // 2
    C1 = w1.shape[-1]
    C2 = w2.shape[-1]
    M = N * H * W

    # Boundary relayout done once (fused by XLA): NCHW -> NHWC, weights to
    # transposed im2col form (Cout, 9*Cin) matching the patch column order
    # (ky, kx, ci) row-major, BN affine params as (C, 1) columns.
    x = jnp.transpose(x_nchw, (0, 2, 3, 1))
    w1t = jnp.transpose(w1.reshape(9 * Cin, C1), (1, 0))
    w2t = jnp.transpose(w2.reshape(9 * C1, C2), (1, 0))
    g1c, b1c = g1.reshape(C1, 1), b1.reshape(C1, 1)
    g2c, b2c = g2.reshape(C2, 1), b2.reshape(C2, 1)

    vmem = pltpu.MemorySpace.VMEM
    out_cm = pl.pallas_call(
        encoder_kernel,
        out_shape=jax.ShapeDtypeStruct((C2, M), jnp.float32),
        in_specs=[pl.BlockSpec(memory_space=vmem) for _ in range(7)],
        out_specs=pl.BlockSpec(memory_space=vmem),
        scratch_shapes=[
            pltpu.VMEM((N, H + 2, W + 2, Cin), jnp.float32),   # padded conv-1 input
            pltpu.VMEM((N, H + 2, W + 2, C1), jnp.float32),    # padded conv-2 input
        ],
        compiler_params=pltpu.CompilerParams(
            vmem_limit_bytes=32 * 1024 * 1024),
    )(x, w1t, g1c, b1c, w2t, g2c, b2c)

    # (C2, N*H*W) lane-dense kernel output -> NCHW in the wrapper.
    return jnp.transpose(out_cm.reshape(C2, N, H, W), (1, 0, 2, 3))


def encoder_reference(x_nchw, params):
    """Pure-JAX reference mirroring PyTorch forward (training-mode BN)."""
    w1, g1, b1, w2, g2, b2 = params
    x = jnp.transpose(x_nchw, (0, 2, 3, 1))
    N, H0, W0, Cin = x.shape
    xp = jnp.max(x.reshape(N, H0 // 2, 2, W0 // 2, 2, Cin), axis=(2, 4))

    def conv_bn_lrelu(h, w, g, b):
        y = lax.conv_general_dilated(
            h, w, window_strides=(1, 1), padding="SAME",
            dimension_numbers=("NHWC", "HWIO", "NHWC"))
        mu = jnp.mean(y, axis=(0, 1, 2), keepdims=True)
        var = jnp.mean((y - mu) ** 2, axis=(0, 1, 2), keepdims=True)
        yn = (y - mu) / jnp.sqrt(var + EPS) * g.reshape(1, 1, 1, -1) \
             + b.reshape(1, 1, 1, -1)
        return jnp.where(yn >= 0, yn, SLOPE * yn)

    h = conv_bn_lrelu(xp, w1, g1, b1)
    h = conv_bn_lrelu(h, w2, g2, b2)
    return jnp.transpose(h, (0, 3, 1, 2))


if __name__ == "__main__":
    N, Cin, Cout, H0, W0 = 2, 4, 8, 16, 16

    key = jax.random.PRNGKey(0)
    k_x, k_w1, k_w2 = jax.random.split(key, 3)
    x = jax.random.normal(k_x, (N, Cin, H0, W0), jnp.float32)

    # conv1: (3,3,Cin,Cout), conv2: (3,3,Cout,Cout) HWIO, no bias;
    # BatchNorm affine params at PyTorch defaults (gamma=1, beta=0).
    w1 = jax.random.normal(k_w1, (3, 3, Cin, Cout), jnp.float32) * 0.1
    w2 = jax.random.normal(k_w2, (3, 3, Cout, Cout), jnp.float32) * 0.1
    g1 = jnp.ones((1, Cout), jnp.float32)
    b1 = jnp.zeros((1, Cout), jnp.float32)
    g2 = jnp.ones((1, Cout), jnp.float32)
    b2 = jnp.zeros((1, Cout), jnp.float32)
    params = (w1, g1, b1, w2, g2, b2)

    out = encoder_forward(x, params)
    out = jax.block_until_ready(out)

    assert out.shape == (N, Cout, H0 // 2, W0 // 2), out.shape

    ref = encoder_reference(x, params)
    assert jnp.allclose(out, ref, rtol=1e-3, atol=1e-3), \
        float(jnp.max(jnp.abs(out - ref)))

    print("KERNEL_OK")
</pallas_src>

<mosaic_0001>
module attributes {stable_mosaic.version = 11 : i64} {
  func.func @encoder_kernel(%arg0: memref<2x16x16x4xf32, #tpu.memory_space<vmem>>, %arg1: memref<8x36xf32, #tpu.memory_space<vmem>>, %arg2: memref<8x1xf32, #tpu.memory_space<vmem>>, %arg3: memref<8x1xf32, #tpu.memory_space<vmem>>, %arg4: memref<8x72xf32, #tpu.memory_space<vmem>>, %arg5: memref<8x1xf32, #tpu.memory_space<vmem>>, %arg6: memref<8x1xf32, #tpu.memory_space<vmem>>, %arg7: memref<8x128xf32, #tpu.memory_space<vmem>>, %arg8: memref<2x10x10x4xf32, #tpu.memory_space<vmem>>, %arg9: memref<2x10x10x8xf32, #tpu.memory_space<vmem>>) attributes {dimension_semantics = [], scalar_prefetch = 0 : i64, scratch_operands = 2 : i64, tpu.core_type = #tpu.core_type<tc>} {
    %c0 = arith.constant 0 : index
    %c0_0 = arith.constant 0 : index
    %c0_1 = arith.constant 0 : index
    %c0_2 = arith.constant 0 : index
    %0 = tpu.strided_load %arg0[%c0, %c0_0, %c0_1, %c0_2] {strides = array<i32: 1, 1, 2, 1>} : memref<2x16x16x4xf32, #tpu.memory_space<vmem>>, vector<2x16x8x4xf32>
    %c0_3 = arith.constant 0 : index
    %c0_4 = arith.constant 0 : index
    %c1 = arith.constant 1 : index
    %c0_5 = arith.constant 0 : index
    %1 = tpu.strided_load %arg0[%c0_3, %c0_4, %c1, %c0_5] {strides = array<i32: 1, 1, 2, 1>} : memref<2x16x16x4xf32, #tpu.memory_space<vmem>>, vector<2x16x8x4xf32>
    %2 = arith.maximumf %0, %1 : vector<2x16x8x4xf32>
    %3 = vector.shape_cast %2 : vector<2x16x8x4xf32> to vector<2x8x2x8x4xf32>
    %cst = arith.constant dense<0xFF800000> : vector<2x8x8x4xf32>
    %4 = vector.multi_reduction <maximumf>, %3, %cst [2] : vector<2x8x2x8x4xf32> to vector<2x8x8x4xf32>
    %cst_6 = arith.constant 0.000000e+00 : f32
    %5 = vector.broadcast %cst_6 : f32 to vector<2x10x10x4xf32>
    %c0_7 = arith.constant 0 : index
    %c0_8 = arith.constant 0 : index
    %c0_9 = arith.constant 0 : index
    %c0_10 = arith.constant 0 : index
    %6 = vector.load %arg8[%c0_7, %c0_8, %c0_9, %c0_10] : memref<2x10x10x4xf32, #tpu.memory_space<vmem>>, vector<2x10x10x4xf32>
    tpu.vector_store %arg8[%c0_7, %c0_8, %c0_9, %c0_10], %5 {strides = array<i32>} : memref<2x10x10x4xf32, #tpu.memory_space<vmem>>, vector<2x10x10x4xf32>,
    %c0_11 = arith.constant 0 : index
    %c1_12 = arith.constant 1 : index
    %c1_13 = arith.constant 1 : index
    %c0_14 = arith.constant 0 : index
    %7 = vector.load %arg8[%c0_11, %c1_12, %c1_13, %c0_14] : memref<2x10x10x4xf32, #tpu.memory_space<vmem>>, vector<2x8x8x4xf32>
    tpu.vector_store %arg8[%c0_11, %c1_12, %c1_13, %c0_14], %4 {strides = array<i32>} : memref<2x10x10x4xf32, #tpu.memory_space<vmem>>, vector<2x8x8x4xf32>,
    %c0_15 = arith.constant 0 : index
    %c0_16 = arith.constant 0 : index
    %c0_17 = arith.constant 0 : index
    %c0_18 = arith.constant 0 : index
    %8 = vector.load %arg8[%c0_15, %c0_16, %c0_17, %c0_18] : memref<2x10x10x4xf32, #tpu.memory_space<vmem>>, vector<2x8x8x4xf32>
    %c0_19 = arith.constant 0 : index
    %c0_20 = arith.constant 0 : index
    %c1_21 = arith.constant 1 : index
    %c0_22 = arith.constant 0 : index
    %9 = vector.load %arg8[%c0_19, %c0_20, %c1_21, %c0_22] : memref<2x10x10x4xf32, #tpu.memory_space<vmem>>, vector<2x8x8x4xf32>
    %c0_23 = arith.constant 0 : index
    %c0_24 = arith.constant 0 : index
    %c2 = arith.constant 2 : index
    %c0_25 = arith.constant 0 : index
    %10 = vector.load %arg8[%c0_23, %c0_24, %c2, %c0_25] : memref<2x10x10x4xf32, #tpu.memory_space<vmem>>, vector<2x8x8x4xf32>
    %c0_26 = arith.constant 0 : index
    %c1_27 = arith.constant 1 : index
    %c0_28 = arith.constant 0 : index
    %c0_29 = arith.constant 0 : index
    %11 = vector.load %arg8[%c0_26, %c1_27, %c0_28, %c0_29] : memref<2x10x10x4xf32, #tpu.memory_space<vmem>>, vector<2x8x8x4xf32>
    %c0_30 = arith.constant 0 : index
    %c1_31 = arith.constant 1 : index
    %c1_32 = arith.constant 1 : index
    %c0_33 = arith.constant 0 : index
    %12 = vector.load %arg8[%c0_30, %c1_31, %c1_32, %c0_33] : memref<2x10x10x4xf32, #tpu.memory_space<vmem>>, vector<2x8x8x4xf32>
    %c0_34 = arith.constant 0 : index
    %c1_35 = arith.constant 1 : index
    %c2_36 = arith.constant 2 : index
    %c0_37 = arith.constant 0 : index
    %13 = vector.load %arg8[%c0_34, %c1_35, %c2_36, %c0_37] : memref<2x10x10x4xf32, #tpu.memory_space<vmem>>, vector<2x8x8x4xf32>
    %c0_38 = arith.constant 0 : index
    %c2_39 = arith.constant 2 : index
    %c0_40 = arith.constant 0 : index
    %c0_41 = arith.constant 0 : index
    %14 = vector.load %arg8[%c0_38, %c2_39, %c0_40, %c0_41] : memref<2x10x10x4xf32, #tpu.memory_space<vmem>>, vector<2x8x8x4xf32>
    %c0_42 = arith.constant 0 : index
    %c2_43 = arith.constant 2 : index
    %c1_44 = arith.constant 1 : index
    %c0_45 = arith.constant 0 : index
    %15 = vector.load %arg8[%c0_42, %c2_43, %c1_44, %c0_45] : memref<2x10x10x4xf32, #tpu.memory_space<vmem>>, vector<2x8x8x4xf32>
    %c0_46 = arith.constant 0 : index
    %c2_47 = arith.constant 2 : index
    %c2_48 = arith.constant 2 : index
    %c0_49 = arith.constant 0 : index
    %16 = vector.load %arg8[%c0_46, %c2_47, %c2_48, %c0_49] : memref<2x10x10x4xf32, #tpu.memory_space<vmem>>, vector<2x8x8x4xf32>
    %17 = tpu.concatenate %8, %9, %10, %11, %12, %13, %14, %15, %16 in 3 : vector<2x8x8x4xf32>, vector<2x8x8x4xf32>, vector<2x8x8x4xf32>, vector<2x8x8x4xf32>, vector<2x8x8x4xf32>, vector<2x8x8x4xf32>, vector<2x8x8x4xf32>, vector<2x8x8x4xf32>, vector<2x8x8x4xf32> -> vector<2x8x8x36xf32>
    %18 = vector.shape_cast %17 : vector<2x8x8x36xf32> to vector<128x36xf32>
    %c0_50 = arith.constant 0 : index
    %c0_51 = arith.constant 0 : index
    %19 = vector.load %arg1[%c0_50, %c0_51] : memref<8x36xf32, #tpu.memory_space<vmem>>, vector<8x36xf32>
    %cst_52 = arith.constant dense<0.000000e+00> : vector<8x128xf32>
    %20 = tpu.matmul %19, %18, %cst_52 {dimension_numbers = #tpu.dot_dimension_numbers<[1], [1], [0], [0], [0, 0, 1, 0], [], []>} : vector<8x36xf32>, vector<128x36xf32>, vector<8x128xf32> -> vector<8x128xf32>
    %cst_53 = arith.constant dense<0.000000e+00> : vector<8xf32>
    %21 = vector.multi_reduction <add>, %20, %cst_53 [1] : vector<8x128xf32> to vector<8xf32>
    %22 = vector.shape_cast %21 : vector<8xf32> to vector<8x1xf32>
    %cst_54 = arith.constant 7.812500e-03 : f32
    %23 = vector.broadcast %cst_54 : f32 to vector<8x1xf32>
    %24 = arith.mulf %22, %23 : vector<8x1xf32>
    %25 = vector.broadcast %24 : vector<8x1xf32> to vector<8x128xf32>
    %26 = arith.subf %20, %25 : vector<8x128xf32>
    %27 = arith.mulf %26, %26 : vector<8x128xf32>
    %cst_55 = arith.constant dense<0.000000e+00> : vector<8xf32>
    %28 = vector.multi_reduction <add>, %27, %cst_55 [1] : vector<8x128xf32> to vector<8xf32>
    %29 = vector.shape_cast %28 : vector<8xf32> to vector<8x1xf32>
    %cst_56 = arith.constant 7.812500e-03 : f32
    %30 = vector.broadcast %cst_56 : f32 to vector<8x1xf32>
    %31 = arith.mulf %29, %30 : vector<8x1xf32>
    %cst_57 = arith.constant 9.99999974E-6 : f32
    %32 = vector.broadcast %cst_57 : f32 to vector<8x1xf32>
    %33 = arith.addf %31, %32 : vector<8x1xf32>
    %34 = math.rsqrt %33 : vector<8x1xf32>
    %35 = vector.broadcast %34 : vector<8x1xf32> to vector<8x128xf32>
    %36 = arith.mulf %26, %35 : vector<8x128xf32>
    %c0_58 = arith.constant 0 : index
    %c0_59 = arith.constant 0 : index
    %37 = vector.load %arg2[%c0_58, %c0_59] : memref<8x1xf32, #tpu.memory_space<vmem>>, vector<8x1xf32>
    %38 = vector.broadcast %37 : vector<8x1xf32> to vector<8x128xf32>
    %39 = arith.mulf %36, %38 : vector<8x128xf32>
    %c0_60 = arith.constant 0 : index
    %c0_61 = arith.constant 0 : index
    %40 = vector.load %arg3[%c0_60, %c0_61] : memref<8x1xf32, #tpu.memory_space<vmem>>, vector<8x1xf32>
    %41 = vector.broadcast %40 : vector<8x1xf32> to vector<8x128xf32>
    %42 = arith.addf %39, %41 : vector<8x128xf32>
    %cst_62 = arith.constant 0.000000e+00 : f32
    %43 = vector.broadcast %cst_62 : f32 to vector<8x128xf32>
    %44 = arith.cmpf oge, %42, %43 : vector<8x128xf32>
    %cst_63 = arith.constant 2.000000e-01 : f32
    %45 = vector.broadcast %cst_63 : f32 to vector<8x128xf32>
    %46 = arith.mulf %45, %42 : vector<8x128xf32>
    %47 = arith.select %44, %42, %46 : vector<8x128xi1>, vector<8x128xf32>
    %48 = tpu.transpose %47, [1, 0] : vector<8x128xf32> -> vector<128x8xf32>
    %49 = vector.shape_cast %48 : vector<128x8xf32> to vector<2x8x8x8xf32>
    %cst_64 = arith.constant 0.000000e+00 : f32
    %50 = vector.broadcast %cst_64 : f32 to vector<2x10x10x8xf32>
    %c0_65 = arith.constant 0 : index
    %c0_66 = arith.constant 0 : index
    %c0_67 = arith.constant 0 : index
    %c0_68 = arith.constant 0 : index
    %51 = vector.load %arg9[%c0_65, %c0_66, %c0_67, %c0_68] : memref<2x10x10x8xf32, #tpu.memory_space<vmem>>, vector<2x10x10x8xf32>
    tpu.vector_store %arg9[%c0_65, %c0_66, %c0_67, %c0_68], %50 {strides = array<i32>} : memref<2x10x10x8xf32, #tpu.memory_space<vmem>>, vector<2x10x10x8xf32>,
    %c0_69 = arith.constant 0 : index
    %c1_70 = arith.constant 1 : index
    %c1_71 = arith.constant 1 : index
    %c0_72 = arith.constant 0 : index
    %52 = vector.load %arg9[%c0_69, %c1_70, %c1_71, %c0_72] : memref<2x10x10x8xf32, #tpu.memory_space<vmem>>, vector<2x8x8x8xf32>
    tpu.vector_store %arg9[%c0_69, %c1_70, %c1_71, %c0_72], %49 {strides = array<i32>} : memref<2x10x10x8xf32, #tpu.memory_space<vmem>>, vector<2x8x8x8xf32>,
    %c0_73 = arith.constant 0 : index
    %c0_74 = arith.constant 0 : index
    %c0_75 = arith.constant 0 : index
    %c0_76 = arith.constant 0 : index
    %53 = vector.load %arg9[%c0_73, %c0_74, %c0_75, %c0_76] : memref<2x10x10x8xf32, #tpu.memory_space<vmem>>, vector<2x8x8x8xf32>
    %c0_77 = arith.constant 0 : index
    %c0_78 = arith.constant 0 : index
    %c1_79 = arith.constant 1 : index
    %c0_80 = arith.constant 0 : index
    %54 = vector.load %arg9[%c0_77, %c0_78, %c1_79, %c0_80] : memref<2x10x10x8xf32, #tpu.memory_space<vmem>>, vector<2x8x8x8xf32>
    %c0_81 = arith.constant 0 : index
    %c0_82 = arith.constant 0 : index
    %c2_83 = arith.constant 2 : index
    %c0_84 = arith.constant 0 : index
    %55 = vector.load %arg9[%c0_81, %c0_82, %c2_83, %c0_84] : memref<2x10x10x8xf32, #tpu.memory_space<vmem>>, vector<2x8x8x8xf32>
    %c0_85 = arith.constant 0 : index
    %c1_86 = arith.constant 1 : index
    %c0_87 = arith.constant 0 : index
    %c0_88 = arith.constant 0 : index
    %56 = vector.load %arg9[%c0_85, %c1_86, %c0_87, %c0_88] : memref<2x10x10x8xf32, #tpu.memory_space<vmem>>, vector<2x8x8x8xf32>
    %c0_89 = arith.constant 0 : index
    %c1_90 = arith.constant 1 : index
    %c1_91 = arith.constant 1 : index
    %c0_92 = arith.constant 0 : index
    %57 = vector.load %arg9[%c0_89, %c1_90, %c1_91, %c0_92] : memref<2x10x10x8xf32, #tpu.memory_space<vmem>>, vector<2x8x8x8xf32>
    %c0_93 = arith.constant 0 : index
    %c1_94 = arith.constant 1 : index
    %c2_95 = arith.constant 2 : index
    %c0_96 = arith.constant 0 : index
    %58 = vector.load %arg9[%c0_93, %c1_94, %c2_95, %c0_96] : memref<2x10x10x8xf32, #tpu.memory_space<vmem>>, vector<2x8x8x8xf32>
    %c0_97 = arith.constant 0 : index
    %c2_98 = arith.constant 2 : index
    %c0_99 = arith.constant 0 : index
    %c0_100 = arith.constant 0 : index
    %59 = vector.load %arg9[%c0_97, %c2_98, %c0_99, %c0_100] : memref<2x10x10x8xf32, #tpu.memory_space<vmem>>, vector<2x8x8x8xf32>
    %c0_101 = arith.constant 0 : index
    %c2_102 = arith.constant 2 : index
    %c1_103 = arith.constant 1 : index
    %c0_104 = arith.constant 0 : index
    %60 = vector.load %arg9[%c0_101, %c2_102, %c1_103, %c0_104] : memref<2x10x10x8xf32, #tpu.memory_space<vmem>>, vector<2x8x8x8xf32>
    %c0_105 = arith.constant 0 : index
    %c2_106 = arith.constant 2 : index
    %c2_107 = arith.constant 2 : index
    %c0_108 = arith.constant 0 : index
    %61 = vector.load %arg9[%c0_105, %c2_106, %c2_107, %c0_108] : memref<2x10x10x8xf32, #tpu.memory_space<vmem>>, vector<2x8x8x8xf32>
    %62 = tpu.concatenate %53, %54, %55, %56, %57, %58, %59, %60, %61 in 3 : vector<2x8x8x8xf32>, vector<2x8x8x8xf32>, vector<2x8x8x8xf32>, vector<2x8x8x8xf32>, vector<2x8x8x8xf32>, vector<2x8x8x8xf32>, vector<2x8x8x8xf32>, vector<2x8x8x8xf32>, vector<2x8x8x8xf32> -> vector<2x8x8x72xf32>
    %63 = vector.shape_cast %62 : vector<2x8x8x72xf32> to vector<128x72xf32>
    %c0_109 = arith.constant 0 : index
    %c0_110 = arith.constant 0 : index
    %64 = vector.load %arg4[%c0_109, %c0_110] : memref<8x72xf32, #tpu.memory_space<vmem>>, vector<8x72xf32>
    %cst_111 = arith.constant dense<0.000000e+00> : vector<8x128xf32>
    %65 = tpu.matmul %64, %63, %cst_111 {dimension_numbers = #tpu.dot_dimension_numbers<[1], [1], [0], [0], [0, 0, 1, 0], [], []>} : vector<8x72xf32>, vector<128x72xf32>, vector<8x128xf32> -> vector<8x128xf32>
    %cst_112 = arith.constant dense<0.000000e+00> : vector<8xf32>
    %66 = vector.multi_reduction <add>, %65, %cst_112 [1] : vector<8x128xf32> to vector<8xf32>
    %67 = vector.shape_cast %66 : vector<8xf32> to vector<8x1xf32>
    %cst_113 = arith.constant 7.812500e-03 : f32
    %68 = vector.broadcast %cst_113 : f32 to vector<8x1xf32>
    %69 = arith.mulf %67, %68 : vector<8x1xf32>
    %70 = vector.broadcast %69 : vector<8x1xf32> to vector<8x128xf32>
    %71 = arith.subf %65, %70 : vector<8x128xf32>
    %72 = arith.mulf %71, %71 : vector<8x128xf32>
    %cst_114 = arith.constant dense<0.000000e+00> : vector<8xf32>
    %73 = vector.multi_reduction <add>, %72, %cst_114 [1] : vector<8x128xf32> to vector<8xf32>
    %74 = vector.shape_cast %73 : vector<8xf32> to vector<8x1xf32>
    %cst_115 = arith.constant 7.812500e-03 : f32
    %75 = vector.broadcast %cst_115 : f32 to vector<8x1xf32>
    %76 = arith.mulf %74, %75 : vector<8x1xf32>
    %cst_116 = arith.constant 9.99999974E-6 : f32
    %77 = vector.broadcast %cst_116 : f32 to vector<8x1xf32>
    %78 = arith.addf %76, %77 : vector<8x1xf32>
    %79 = math.rsqrt %78 : vector<8x1xf32>
    %80 = vector.broadcast %79 : vector<8x1xf32> to vector<8x128xf32>
    %81 = arith.mulf %71, %80 : vector<8x128xf32>
    %c0_117 = arith.constant 0 : index
    %c0_118 = arith.constant 0 : index
    %82 = vector.load %arg5[%c0_117, %c0_118] : memref<8x1xf32, #tpu.memory_space<vmem>>, vector<8x1xf32>
    %83 = vector.broadcast %82 : vector<8x1xf32> to vector<8x128xf32>
    %84 = arith.mulf %81, %83 : vector<8x128xf32>
    %c0_119 = arith.constant 0 : index
    %c0_120 = arith.constant 0 : index
    %85 = vector.load %arg6[%c0_119, %c0_120] : memref<8x1xf32, #tpu.memory_space<vmem>>, vector<8x1xf32>
    %86 = vector.broadcast %85 : vector<8x1xf32> to vector<8x128xf32>
    %87 = arith.addf %84, %86 : vector<8x128xf32>
    %cst_121 = arith.constant 0.000000e+00 : f32
    %88 = vector.broadcast %cst_121 : f32 to vector<8x128xf32>
    %89 = arith.cmpf oge, %87, %88 : vector<8x128xf32>
    %cst_122 = arith.constant 2.000000e-01 : f32
    %90 = vector.broadcast %cst_122 : f32 to vector<8x128xf32>
    %91 = arith.mulf %90, %87 : vector<8x128xf32>
    %92 = arith.select %89, %87, %91 : vector<8x128xi1>, vector<8x128xf32>
    %c0_123 = arith.constant 0 : index
    %c0_124 = arith.constant 0 : index
    %93 = vector.load %arg7[%c0_123, %c0_124] : memref<8x128xf32, #tpu.memory_space<vmem>>, vector<8x128xf32>
    tpu.vector_store %arg7[%c0_123, %c0_124], %92 {strides = array<i32>} : memref<8x128xf32, #tpu.memory_space<vmem>>, vector<8x128xf32>,
    return
  }
}

</mosaic_0001>

<llo_original>
// kernel: tpu_custom_call.1
$region0: #{tpu_custom_call.1}
  #allocation0 [shape = 'u32[]', space=smem, size = 0x4, offset = 0x4, fixed_abs, tag = 'smem constant byte address 0x4 - core index']
  #allocation1 [shape = 'u32[144,128]{1,0:T(1,128)}', space=vmem, size = 0x12000, scoped, tag = 'internal scratch']
  #allocation2 [shape = 'f32[2,10,10,4]{3,2,1,0:T(8,128)}', space=vmem, size = 0x28000, scoped, tag = 'scratch operand']
  #allocation3 [shape = 'f32[2,10,10,8]{3,2,1,0:T(8,128)}', space=vmem, size = 0x28000, scoped, tag = 'scratch operand']
  %s0 = inlined_call_operand.vmem [shape: f32[2,16,16,4], index: 0, kind: input, shape index: {}]
  %s1 = inlined_call_operand.vmem [shape: f32[8,36], index: 1, kind: input, shape index: {}]
  %s2 = inlined_call_operand.vmem [shape: f32[8,1], index: 2, kind: input, shape index: {}]
  %s3 = inlined_call_operand.vmem [shape: f32[8,1], index: 3, kind: input, shape index: {}]
  %s4 = inlined_call_operand.vmem [shape: f32[8,72], index: 4, kind: input, shape index: {}]
  %s5 = inlined_call_operand.vmem [shape: f32[8,1], index: 5, kind: input, shape index: {}]
  %s6 = inlined_call_operand.vmem [shape: f32[8,1], index: 6, kind: input, shape index: {}]
  %s7 = inlined_call_operand.hbm [shape: f32[8,128], index: 7, kind: output, shape index: {}]
  %s8 = sld [smem:[#allocation0]]
  $region38: #{tpu_custom_call.1} parent=0
    _
  %s10 = ssub.s32 1, %s8
  %s11 = scalar_select 0, %s10, %s8
  $region1: #{tpu_custom_call.1} parent=0
    #allocation4 [shape = 'u8[4096]{0}', space=vmem, size = 0x1000, scoped, tag = 'output window, operand 0, single buffered']
    #allocation5 [shape = 's32[1]{0}', space=sflag, size = 0x4, scoped, tag = 'scoped memory for tpu_custom_call.1']
    %12 = vsyncpa [#allocation5], 0
    // Predicated region
    $region2: #{tpu_custom_call.1} parent=1 // pred_check
      _
    $region3: #{tpu_custom_call.1} parent=1 // pred_check_branch
      %14 = sbr.rel (0) target = $region5
    $region4: #{tpu_custom_call.1} parent=1 // pred_region
      _
    $region5: #{tpu_custom_call.1} parent=1 // pred_fallthru
      _
    // Predicated region
    $region6: #{tpu_custom_call.1} parent=1 // pred_check
      _
    $region7: #{tpu_custom_call.1} parent=1 // pred_check_branch
      %16 = sbr.rel (0) target = $region9
    $region8: #{tpu_custom_call.1} parent=1 // pred_region
      _
    $region9: #{tpu_custom_call.1} parent=1 // pred_fallthru
      _
    // Predicated region
    $region10: #{tpu_custom_call.1} parent=1 // pred_check
      _
    $region11: #{tpu_custom_call.1} parent=1 // pred_check_branch
      %18 = sbr.rel (0) target = $region13
    $region12: #{tpu_custom_call.1} parent=1 // pred_region
      _
    $region13: #{tpu_custom_call.1} parent=1 // pred_fallthru
      _
    // Predicated region
    $region14: #{tpu_custom_call.1} parent=1 // pred_check
      _
    $region15: #{tpu_custom_call.1} parent=1 // pred_check_branch
      %20 = sbr.rel (0) target = $region17
    $region16: #{tpu_custom_call.1} parent=1 // pred_region
      _
    $region17: #{tpu_custom_call.1} parent=1 // pred_fallthru
      _
    // Predicated region
    $region18: #{tpu_custom_call.1} parent=1 // pred_check
      _
    $region19: #{tpu_custom_call.1} parent=1 // pred_check_branch
      %22 = sbr.rel (0) target = $region21
    $region20: #{tpu_custom_call.1} parent=1 // pred_region
      _
    $region21: #{tpu_custom_call.1} parent=1 // pred_fallthru
      _
    // Predicated region
    $region22: #{tpu_custom_call.1} parent=1 // pred_check
      _
    $region23: #{tpu_custom_call.1} parent=1 // pred_check_branch
      %24 = sbr.rel (0) target = $region25
    $region24: #{tpu_custom_call.1} parent=1 // pred_region
      _
    $region25: #{tpu_custom_call.1} parent=1 // pred_fallthru
      _
    // Predicated region
    $region26: #{tpu_custom_call.1} parent=1 // pred_check
      _
    $region27: #{tpu_custom_call.1} parent=1 // pred_check_branch
      %26 = sbr.rel (0) target = $region29
    $region28: #{tpu_custom_call.1} parent=1 // pred_region
      _
    $region29: #{tpu_custom_call.1} parent=1 // pred_fallthru
      _
    %v27 = vld [vmem:[%s0] ss:$2 sm:$0xff]
    %s28 = scalar_lea.vmem %s0, 16
    %v29 = vld [vmem:[%s28] ss:$2 sm:$0xff]
    %s30 = scalar_lea.vmem %s0, 32
    %v31 = vld [vmem:[%s30] ss:$2 sm:$0xff]
    %s32 = scalar_lea.vmem %s0, 48
    %v33 = vld [vmem:[%s32] ss:$2 sm:$0xff]
    %s34 = scalar_lea.vmem %s0, 64
    %v35 = vld [vmem:[%s34] ss:$2 sm:$0xff]
    %s36 = scalar_lea.vmem %s0, 80
    %v37 = vld [vmem:[%s36] ss:$2 sm:$0xff]
    %s38 = scalar_lea.vmem %s0, 96
    %v39 = vld [vmem:[%s38] ss:$2 sm:$0xff]
    %s40 = scalar_lea.vmem %s0, 112
    %v41 = vld [vmem:[%s40] ss:$2 sm:$0xff]
    %s42 = scalar_lea.vmem %s0, 128
    %v43 = vld [vmem:[%s42] ss:$2 sm:$0xff]
    %s44 = scalar_lea.vmem %s0, 144
    %v45 = vld [vmem:[%s44] ss:$2 sm:$0xff]
    %s46 = scalar_lea.vmem %s0, 160
    %v47 = vld [vmem:[%s46] ss:$2 sm:$0xff]
    %s48 = scalar_lea.vmem %s0, 176
    %v49 = vld [vmem:[%s48] ss:$2 sm:$0xff]
    %s50 = scalar_lea.vmem %s0, 192
    %v51 = vld [vmem:[%s50] ss:$2 sm:$0xff]
    %s52 = scalar_lea.vmem %s0, 208
    %v53 = vld [vmem:[%s52] ss:$2 sm:$0xff]
    %s54 = scalar_lea.vmem %s0, 224
    %v55 = vld [vmem:[%s54] ss:$2 sm:$0xff]
    %s56 = scalar_lea.vmem %s0, 240
    %v57 = vld [vmem:[%s56] ss:$2 sm:$0xff]
    %s58 = scalar_lea.vmem %s0, 256
    %v59 = vld [vmem:[%s58] ss:$2 sm:$0xff]
    %s60 = scalar_lea.vmem %s0, 272
    %v61 = vld [vmem:[%s60] ss:$2 sm:$0xff]
    %s62 = scalar_lea.vmem %s0, 288
    %v63 = vld [vmem:[%s62] ss:$2 sm:$0xff]
    %s64 = scalar_lea.vmem %s0, 304
    %v65 = vld [vmem:[%s64] ss:$2 sm:$0xff]
    %s66 = scalar_lea.vmem %s0, 320
    %v67 = vld [vmem:[%s66] ss:$2 sm:$0xff]
    %s68 = scalar_lea.vmem %s0, 336
    %v69 = vld [vmem:[%s68] ss:$2 sm:$0xff]
    %s70 = scalar_lea.vmem %s0, 352
    %v71 = vld [vmem:[%s70] ss:$2 sm:$0xff]
    %s72 = scalar_lea.vmem %s0, 368
    %v73 = vld [vmem:[%s72] ss:$2 sm:$0xff]
    %s74 = scalar_lea.vmem %s0, 384
    %v75 = vld [vmem:[%s74] ss:$2 sm:$0xff]
    %s76 = scalar_lea.vmem %s0, 400
    %v77 = vld [vmem:[%s76] ss:$2 sm:$0xff]
    %s78 = scalar_lea.vmem %s0, 416
    %v79 = vld [vmem:[%s78] ss:$2 sm:$0xff]
    %s80 = scalar_lea.vmem %s0, 432
    %v81 = vld [vmem:[%s80] ss:$2 sm:$0xff]
    %s82 = scalar_lea.vmem %s0, 448
    %v83 = vld [vmem:[%s82] ss:$2 sm:$0xff]
    %s84 = scalar_lea.vmem %s0, 464
    %v85 = vld [vmem:[%s84] ss:$2 sm:$0xff]
    %s86 = scalar_lea.vmem %s0, 480
    %v87 = vld [vmem:[%s86] ss:$2 sm:$0xff]
    %s88 = scalar_lea.vmem %s0, 496
    %v89 = vld [vmem:[%s88] ss:$2 sm:$0xff]
    %s90 = scalar_lea.vmem %s0, 1
    %v91 = vld [vmem:[%s90] ss:$2 sm:$0xff]
    %s92 = scalar_lea.vmem %s0, 17
    %v93 = vld [vmem:[%s92] ss:$2 sm:$0xff]
    %s94 = scalar_lea.vmem %s0, 33
    %v95 = vld [vmem:[%s94] ss:$2 sm:$0xff]
    %s96 = scalar_lea.vmem %s0, 49
    %v97 = vld [vmem:[%s96] ss:$2 sm:$0xff]
    %s98 = scalar_lea.vmem %s0, 65
    %v99 = vld [vmem:[%s98] ss:$2 sm:$0xff]
    %s100 = scalar_lea.vmem %s0, 81
    %v101 = vld [vmem:[%s100] ss:$2 sm:$0xff]
    %s102 = scalar_lea.vmem %s0, 97
    %v103 = vld [vmem:[%s102] ss:$2 sm:$0xff]
    %s104 = scalar_lea.vmem %s0, 113
    %v105 = vld [vmem:[%s104] ss:$2 sm:$0xff]
    %s106 = scalar_lea.vmem %s0, 129
    %v107 = vld [vmem:[%s106] ss:$2 sm:$0xff]
    %s108 = scalar_lea.vmem %s0, 145
    %v109 = vld [vmem:[%s108] ss:$2 sm:$0xff]
    %s110 = scalar_lea.vmem %s0, 161
    %v111 = vld [vmem:[%s110] ss:$2 sm:$0xff]
    %s112 = scalar_lea.vmem %s0, 177
    %v113 = vld [vmem:[%s112] ss:$2 sm:$0xff]
    %s114 = scalar_lea.vmem %s0, 193
    %v115 = vld [vmem:[%s114] ss:$2 sm:$0xff]
    %s116 = scalar_lea.vmem %s0, 209
    %v117 = vld [vmem:[%s116] ss:$2 sm:$0xff]
    %s118 = scalar_lea.vmem %s0, 225
    %v119 = vld [vmem:[%s118] ss:$2 sm:$0xff]
    %s120 = scalar_lea.vmem %s0, 241
    %v121 = vld [vmem:[%s120] ss:$2 sm:$0xff]
    %s122 = scalar_lea.vmem %s0, 257
    %v123 = vld [vmem:[%s122] ss:$2 sm:$0xff]
    %s124 = scalar_lea.vmem %s0, 273
    %v125 = vld [vmem:[%s124] ss:$2 sm:$0xff]
    %s126 = scalar_lea.vmem %s0, 289
    %v127 = vld [vmem:[%s126] ss:$2 sm:$0xff]
    %s128 = scalar_lea.vmem %s0, 305
    %v129 = vld [vmem:[%s128] ss:$2 sm:$0xff]
    %s130 = scalar_lea.vmem %s0, 321
    %v131 = vld [vmem:[%s130] ss:$2 sm:$0xff]
    %s132 = scalar_lea.vmem %s0, 337
    %v133 = vld [vmem:[%s132] ss:$2 sm:$0xff]
    %s134 = scalar_lea.vmem %s0, 353
    %v135 = vld [vmem:[%s134] ss:$2 sm:$0xff]
    %s136 = scalar_lea.vmem %s0, 369
    %v137 = vld [vmem:[%s136] ss:$2 sm:$0xff]
    %s138 = scalar_lea.vmem %s0, 385
    %v139 = vld [vmem:[%s138] ss:$2 sm:$0xff]
    %s140 = scalar_lea.vmem %s0, 401
    %v141 = vld [vmem:[%s140] ss:$2 sm:$0xff]
    %s142 = scalar_lea.vmem %s0, 417
    %v143 = vld [vmem:[%s142] ss:$2 sm:$0xff]
    %s144 = scalar_lea.vmem %s0, 433
    %v145 = vld [vmem:[%s144] ss:$2 sm:$0xff]
    %s146 = scalar_lea.vmem %s0, 449
    %v147 = vld [vmem:[%s146] ss:$2 sm:$0xff]
    %s148 = scalar_lea.vmem %s0, 465
    %v149 = vld [vmem:[%s148] ss:$2 sm:$0xff]
    %s150 = scalar_lea.vmem %s0, 481
    %v151 = vld [vmem:[%s150] ss:$2 sm:$0xff]
    %s152 = scalar_lea.vmem %s0, 497
    %v153 = vld [vmem:[%s152] ss:$2 sm:$0xff]
    %v154 = vmax.f32 %v27, %v91
    %v155 = vmax.f32 %v29, %v93
    %v156 = vmax.f32 %v31, %v95
    %v157 = vmax.f32 %v33, %v97
    %v158 = vmax.f32 %v35, %v99
    %v159 = vmax.f32 %v37, %v101
    %v160 = vmax.f32 %v39, %v103
    %v161 = vmax.f32 %v41, %v105
    %v162 = vmax.f32 %v43, %v107
    %v163 = vmax.f32 %v45, %v109
    %v164 = vmax.f32 %v47, %v111
    %v165 = vmax.f32 %v49, %v113
    %v166 = vmax.f32 %v51, %v115
    %v167 = vmax.f32 %v53, %v117
    %v168 = vmax.f32 %v55, %v119
    %v169 = vmax.f32 %v57, %v121
    %v170 = vmax.f32 %v59, %v123
    %v171 = vmax.f32 %v61, %v125
    %v172 = vmax.f32 %v63, %v127
    %v173 = vmax.f32 %v65, %v129
    %v174 = vmax.f32 %v67, %v131
    %v175 = vmax.f32 %v69, %v133
    %v176 = vmax.f32 %v71, %v135
    %v177 = vmax.f32 %v73, %v137
    %v178 = vmax.f32 %v75, %v139
    %v179 = vmax.f32 %v77, %v141
    %v180 = vmax.f32 %v79, %v143
    %v181 = vmax.f32 %v81, %v145
    %v182 = vmax.f32 %v83, %v147
    %v183 = vmax.f32 %v85, %v149
    %v184 = vmax.f32 %v87, %v151
    %v185 = vmax.f32 %v89, %v153
    %vm186 = vcmask 31744
    %v187 = vsel %vm186, %v154, -inf
    %v188 = vsel %vm186, %v155, -inf
    %v189 = vmax.f32 %v187, %v188
    %v190 = vsel %vm186, %v156, -inf
    %v191 = vsel %vm186, %v157, -inf
    %v192 = vmax.f32 %v190, %v191
    %v193 = vsel %vm186, %v158, -inf
    %v194 = vsel %vm186, %v159, -inf
    %v195 = vmax.f32 %v193, %v194
    %v196 = vsel %vm186, %v160, -inf
    %v197 = vsel %vm186, %v161, -inf
    %v198 = vmax.f32 %v196, %v197
    %v199 = vsel %vm186, %v162, -inf
    %v200 = vsel %vm186, %v163, -inf
    %v201 = vmax.f32 %v199, %v200
    %v202 = vsel %vm186, %v164, -inf
    %v203 = vsel %vm186, %v165, -inf
    %v204 = vmax.f32 %v202, %v203
    %v205 = vsel %vm186, %v166, -inf
    %v206 = vsel %vm186, %v167, -inf
    %v207 = vmax.f32 %v205, %v206
    %v208 = vsel %vm186, %v168, -inf
    %v209 = vsel %vm186, %v169, -inf
    %v210 = vmax.f32 %v208, %v209
    %v211 = vsel %vm186, %v170, -inf
    %v212 = vsel %vm186, %v171, -inf
    %v213 = vmax.f32 %v211, %v212
    %v214 = vsel %vm186, %v172, -inf
    %v215 = vsel %vm186, %v173, -inf
    %v216 = vmax.f32 %v214, %v215
    %v217 = vsel %vm186, %v174, -inf
    %v218 = vsel %vm186, %v175, -inf
    %v219 = vmax.f32 %v217, %v218
    %v220 = vsel %vm186, %v176, -inf
    %v221 = vsel %vm186, %v177, -inf
    %v222 = vmax.f32 %v220, %v221
    %v223 = vsel %vm186, %v178, -inf
    %v224 = vsel %vm186, %v179, -inf
    %v225 = vmax.f32 %v223, %v224
    %v226 = vsel %vm186, %v180, -inf
    %v227 = vsel %vm186, %v181, -inf
    %v228 = vmax.f32 %v226, %v227
    %v229 = vsel %vm186, %v182, -inf
    %v230 = vsel %vm186, %v183, -inf
    %v231 = vmax.f32 %v229, %v230
    %v232 = vsel %vm186, %v184, -inf
    %v233 = vsel %vm186, %v185, -inf
    %v234 = vmax.f32 %v232, %v233
    %235 = vst.msk [vmem:[#allocation2] sm:$0xff] %vm186, 0.0
    %vm236 = vcmask 25600
    %237 = vst.msk [vmem:[#allocation2 + $0x8] sm:$0x3] %vm236, 0.0
    %238 = vst.msk [vmem:[#allocation2 + $0x10] sm:$0xff] %vm186, 0.0
    %239 = vst.msk [vmem:[#allocation2 + $0x18] sm:$0x3] %vm236, 0.0
    %240 = vst.msk [vmem:[#allocation2 + $0x20] sm:$0xff] %vm186, 0.0
    %241 = vst.msk [vmem:[#allocation2 + $0x28] sm:$0x3] %vm236, 0.0
    %242 = vst.msk [vmem:[#allocation2 + $0x30] sm:$0xff] %vm186, 0.0
    %243 = vst.msk [vmem:[#allocation2 + $0x38] sm:$0x3] %vm236, 0.0
    %244 = vst.msk [vmem:[#allocation2 + $0x40] sm:$0xff] %vm186, 0.0
    %245 = vst.msk [vmem:[#allocation2 + $0x48] sm:$0x3] %vm236, 0.0
    %246 = vst.msk [vmem:[#allocation2 + $0x50] sm:$0xff] %vm186, 0.0
    %247 = vst.msk [vmem:[#allocation2 + $0x58] sm:$0x3] %vm236, 0.0
    %248 = vst.msk [vmem:[#allocation2 + $0x60] sm:$0xff] %vm186, 0.0
    %249 = vst.msk [vmem:[#allocation2 + $0x68] sm:$0x3] %vm236, 0.0
    %250 = vst.msk [vmem:[#allocation2 + $0x70] sm:$0xff] %vm186, 0.0
    %251 = vst.msk [vmem:[#allocation2 + $0x78] sm:$0x3] %vm236, 0.0
    %252 = vst.msk [vmem:[#allocation2 + $0x80] sm:$0xff] %vm186, 0.0
    %253 = vst.msk [vmem:[#allocation2 + $0x88] sm:$0x3] %vm236, 0.0
    %254 = vst.msk [vmem:[#allocation2 + $0x90] sm:$0xff] %vm186, 0.0
    %255 = vst.msk [vmem:[#allocation2 + $0x98] sm:$0x3] %vm236, 0.0
    %256 = vst.msk [vmem:[#allocation2 + $0xa0] sm:$0xff] %vm186, 0.0
    %257 = vst.msk [vmem:[#allocation2 + $0xa8] sm:$0x3] %vm236, 0.0
    %258 = vst.msk [vmem:[#allocation2 + $0xb0] sm:$0xff] %vm186, 0.0
    %259 = vst.msk [vmem:[#allocation2 + $0xb8] sm:$0x3] %vm236, 0.0
    %260 = vst.msk [vmem:[#allocation2 + $0xc0] sm:$0xff] %vm186, 0.0
    %261 = vst.msk [vmem:[#allocation2 + $0xc8] sm:$0x3] %vm236, 0.0
    %262 = vst.msk [vmem:[#allocation2 + $0xd0] sm:$0xff] %vm186, 0.0
    %263 = vst.msk [vmem:[#allocation2 + $0xd8] sm:$0x3] %vm236, 0.0
    %264 = vst.msk [vmem:[#allocation2 + $0xe0] sm:$0xff] %vm186, 0.0
    %265 = vst.msk [vmem:[#allocation2 + $0xe8] sm:$0x3] %vm236, 0.0
    %266 = vst.msk [vmem:[#allocation2 + $0xf0] sm:$0xff] %vm186, 0.0
    %267 = vst.msk [vmem:[#allocation2 + $0xf8] sm:$0x3] %vm236, 0.0
    %268 = vst.msk [vmem:[#allocation2 + $0x100] sm:$0xff] %vm186, 0.0
    %269 = vst.msk [vmem:[#allocation2 + $0x108] sm:$0x3] %vm236, 0.0
    %270 = vst.msk [vmem:[#allocation2 + $0x110] sm:$0xff] %vm186, 0.0
    %271 = vst.msk [vmem:[#allocation2 + $0x118] sm:$0x3] %vm236, 0.0
    %272 = vst.msk [vmem:[#allocation2 + $0x120] sm:$0xff] %vm186, 0.0
    %273 = vst.msk [vmem:[#allocation2 + $0x128] sm:$0x3] %vm236, 0.0
    %274 = vst.msk [vmem:[#allocation2 + $0x130] sm:$0xff] %vm186, 0.0
    %275 = vst.msk [vmem:[#allocation2 + $0x138] sm:$0x3] %vm236, 0.0
    %s276 = scalar_lea.vmem [#allocation2], 16
    %277 = vst.msk [vmem:[%s276 + $0x1] sm:$0xff] %vm186, %v189
    %278 = vst.msk [vmem:[%s276 + $0x11] sm:$0xff] %vm186, %v192
    %279 = vst.msk [vmem:[%s276 + $0x21] sm:$0xff] %vm186, %v195
    %280 = vst.msk [vmem:[%s276 + $0x31] sm:$0xff] %vm186, %v198
    %281 = vst.msk [vmem:[%s276 + $0x41] sm:$0xff] %vm186, %v201
    %282 = vst.msk [vmem:[%s276 + $0x51] sm:$0xff] %vm186, %v204
    %283 = vst.msk [vmem:[%s276 + $0x61] sm:$0xff] %vm186, %v207
    %284 = vst.msk [vmem:[%s276 + $0x71] sm:$0xff] %vm186, %v210
    %285 = vst.msk [vmem:[%s276 + $0xa1] sm:$0xff] %vm186, %v213
    %286 = vst.msk [vmem:[%s276 + $0xb1] sm:$0xff] %vm186, %v216
    %287 = vst.msk [vmem:[%s276 + $0xc1] sm:$0xff] %vm186, %v219
    %288 = vst.msk [vmem:[%s276 + $0xd1] sm:$0xff] %vm186, %v222
    %289 = vst.msk [vmem:[%s276 + $0xe1] sm:$0xff] %vm186, %v225
    %290 = vst.msk [vmem:[%s276 + $0xf1] sm:$0xff] %vm186, %v228
    %291 = vst.msk [vmem:[%s276 + $0x101] sm:$0xff] %vm186, %v231
    %292 = vst.msk [vmem:[%s276 + $0x111] sm:$0xff] %vm186, %v234
    %v293 = vld [vmem:[#allocation2] sm:$0xff]
    %v294 = vld [vmem:[#allocation2 + $0x10] sm:$0xff]
    %v295 = vld [vmem:[#allocation2 + $0x20] sm:$0xff]
    %v296 = vld [vmem:[#allocation2 + $0x30] sm:$0xff]
    %v297 = vld [vmem:[#allocation2 + $0x40] sm:$0xff]
    %v298 = vld [vmem:[#allocation2 + $0x50] sm:$0xff]
    %v299 = vld [vmem:[#allocation2 + $0x60] sm:$0xff]
    %v300 = vld [vmem:[#allocation2 + $0x70] sm:$0xff]
    %v301 = vld [vmem:[#allocation2 + $0xa0] sm:$0xff]
    %v302 = vld [vmem:[#allocation2 + $0xb0] sm:$0xff]
    %v303 = vld [vmem:[#allocation2 + $0xc0] sm:$0xff]
    %v304 = vld [vmem:[#allocation2 + $0xd0] sm:$0xff]
    %v305 = vld [vmem:[#allocation2 + $0xe0] sm:$0xff]
    %v306 = vld [vmem:[#allocation2 + $0xf0] sm:$0xff]
    %v307 = vld [vmem:[#allocation2 + $0x100] sm:$0xff]
    %v308 = vld [vmem:[#allocation2 + $0x110] sm:$0xff]
    %v309 = vld [vmem:[#allocation2 + $0x1] sm:$0xff]
    %v310 = vld [vmem:[#allocation2 + $0x11] sm:$0xff]
    %v311 = vld [vmem:[#allocation2 + $0x21] sm:$0xff]
    %v312 = vld [vmem:[#allocation2 + $0x31] sm:$0xff]
    %v313 = vld [vmem:[#allocation2 + $0x41] sm:$0xff]
    %v314 = vld [vmem:[#allocation2 + $0x51] sm:$0xff]
    %v315 = vld [vmem:[#allocation2 + $0x61] sm:$0xff]
    %v316 = vld [vmem:[#allocation2 + $0x71] sm:$0xff]
    %v317 = vld [vmem:[#allocation2 + $0xa1] sm:$0xff]
    %v318 = vld [vmem:[#allocation2 + $0xb1] sm:$0xff]
    %v319 = vld [vmem:[#allocation2 + $0xc1] sm:$0xff]
    %v320 = vld [vmem:[#allocation2 + $0xd1] sm:$0xff]
    %v321 = vld [vmem:[#allocation2 + $0xe1] sm:$0xff]
    %v322 = vld [vmem:[#allocation2 + $0xf1] sm:$0xff]
    %v323 = vld [vmem:[#allocation2 + $0x101] sm:$0xff]
    %v324 = vld [vmem:[#allocation2 + $0x111] sm:$0xff]
    %v325 = vld [vmem:[#allocation2 + $0x2] sm:$0xff]
    %v326 = vld [vmem:[#allocation2 + $0x12] sm:$0xff]
    %v327 = vld [vmem:[#allocation2 + $0x22] sm:$0xff]
    %v328 = vld [vmem:[#allocation2 + $0x32] sm:$0xff]
    %v329 = vld [vmem:[#allocation2 + $0x42] sm:$0xff]
    %v330 = vld [vmem:[#allocation2 + $0x52] sm:$0xff]
    %v331 = vld [vmem:[#allocation2 + $0x62] sm:$0xff]
    %v332 = vld [vmem:[#allocation2 + $0x72] sm:$0xff]
    %v333 = vld [vmem:[#allocation2 + $0xa2] sm:$0xff]
    %v334 = vld [vmem:[#allocation2 + $0xb2] sm:$0xff]
    %v335 = vld [vmem:[#allocation2 + $0xc2] sm:$0xff]
    %v336 = vld [vmem:[#allocation2 + $0xd2] sm:$0xff]
    %v337 = vld [vmem:[#allocation2 + $0xe2] sm:$0xff]
    %v338 = vld [vmem:[#allocation2 + $0xf2] sm:$0xff]
    %v339 = vld [vmem:[#allocation2 + $0x102] sm:$0xff]
    %v340 = vld [vmem:[#allocation2 + $0x112] sm:$0xff]
    %v341 = vld [vmem:[%s276] sm:$0xff]
    %v342 = vld [vmem:[%s276 + $0x10] sm:$0xff]
    %v343 = vld [vmem:[%s276 + $0x20] sm:$0xff]
    %v344 = vld [vmem:[%s276 + $0x30] sm:$0xff]
    %v345 = vld [vmem:[%s276 + $0x40] sm:$0xff]
    %v346 = vld [vmem:[%s276 + $0x50] sm:$0xff]
    %v347 = vld [vmem:[%s276 + $0x60] sm:$0xff]
    %v348 = vld [vmem:[%s276 + $0x70] sm:$0xff]
    %v349 = vld [vmem:[%s276 + $0xa0] sm:$0xff]
    %v350 = vld [vmem:[%s276 + $0xb0] sm:$0xff]
    %v351 = vld [vmem:[%s276 + $0xc0] sm:$0xff]
    %v352 = vld [vmem:[%s276 + $0xd0] sm:$0xff]
    %v353 = vld [vmem:[%s276 + $0xe0] sm:$0xff]
    %v354 = vld [vmem:[%s276 + $0xf0] sm:$0xff]
    %v355 = vld [vmem:[%s276 + $0x100] sm:$0xff]
    %v356 = vld [vmem:[%s276 + $0x110] sm:$0xff]
    %v357 = vld [vmem:[%s276 + $0x1] sm:$0xff]
    %v358 = vld [vmem:[%s276 + $0x11] sm:$0xff]
    %v359 = vld [vmem:[%s276 + $0x21] sm:$0xff]
    %v360 = vld [vmem:[%s276 + $0x31] sm:$0xff]
    %v361 = vld [vmem:[%s276 + $0x41] sm:$0xff]
    %v362 = vld [vmem:[%s276 + $0x51] sm:$0xff]
    %v363 = vld [vmem:[%s276 + $0x61] sm:$0xff]
    %v364 = vld [vmem:[%s276 + $0x71] sm:$0xff]
    %v365 = vld [vmem:[%s276 + $0xa1] sm:$0xff]
    %v366 = vld [vmem:[%s276 + $0xb1] sm:$0xff]
    %v367 = vld [vmem:[%s276 + $0xc1] sm:$0xff]
    %v368 = vld [vmem:[%s276 + $0xd1] sm:$0xff]
    %v369 = vld [vmem:[%s276 + $0xe1] sm:$0xff]
    %v370 = vld [vmem:[%s276 + $0xf1] sm:$0xff]
    %v371 = vld [vmem:[%s276 + $0x101] sm:$0xff]
    %v372 = vld [vmem:[%s276 + $0x111] sm:$0xff]
    %v373 = vld [vmem:[%s276 + $0x2] sm:$0xff]
    %v374 = vld [vmem:[%s276 + $0x12] sm:$0xff]
    %v375 = vld [vmem:[%s276 + $0x22] sm:$0xff]
    %v376 = vld [vmem:[%s276 + $0x32] sm:$0xff]
    %v377 = vld [vmem:[%s276 + $0x42] sm:$0xff]
    %v378 = vld [vmem:[%s276 + $0x52] sm:$0xff]
    %v379 = vld [vmem:[%s276 + $0x62] sm:$0xff]
    %v380 = vld [vmem:[%s276 + $0x72] sm:$0xff]
    %v381 = vld [vmem:[%s276 + $0xa2] sm:$0xff]
    %v382 = vld [vmem:[%s276 + $0xb2] sm:$0xff]
    %v383 = vld [vmem:[%s276 + $0xc2] sm:$0xff]
    %v384 = vld [vmem:[%s276 + $0xd2] sm:$0xff]
    %v385 = vld [vmem:[%s276 + $0xe2] sm:$0xff]
    %v386 = vld [vmem:[%s276 + $0xf2] sm:$0xff]
    %v387 = vld [vmem:[%s276 + $0x102] sm:$0xff]
    %v388 = vld [vmem:[%s276 + $0x112] sm:$0xff]
    %s389 = scalar_lea.vmem [#allocation2], 32
    %v390 = vld [vmem:[%s389] sm:$0xff]
    %v391 = vld [vmem:[%s389 + $0x10] sm:$0xff]
    %v392 = vld [vmem:[%s389 + $0x20] sm:$0xff]
    %v393 = vld [vmem:[%s389 + $0x30] sm:$0xff]
    %v394 = vld [vmem:[%s389 + $0x40] sm:$0xff]
    %v395 = vld [vmem:[%s389 + $0x50] sm:$0xff]
    %v396 = vld [vmem:[%s389 + $0x60] sm:$0xff]
    %v397 = vld [vmem:[%s389 + $0x70] sm:$0xff]
    %v398 = vld [vmem:[%s389 + $0xa0] sm:$0xff]
    %v399 = vld [vmem:[%s389 + $0xb0] sm:$0xff]
    %v400 = vld [vmem:[%s389 + $0xc0] sm:$0xff]
    %v401 = vld [vmem:[%s389 + $0xd0] sm:$0xff]
    %v402 = vld [vmem:[%s389 + $0xe0] sm:$0xff]
    %v403 = vld [vmem:[%s389 + $0xf0] sm:$0xff]
    %v404 = vld [vmem:[%s389 + $0x100] sm:$0xff]
    %v405 = vld [vmem:[%s389 + $0x110] sm:$0xff]
    %v406 = vld [vmem:[%s389 + $0x1] sm:$0xff]
    %v407 = vld [vmem:[%s389 + $0x11] sm:$0xff]
    %v408 = vld [vmem:[%s389 + $0x21] sm:$0xff]
    %v409 = vld [vmem:[%s389 + $0x31] sm:$0xff]
    %v410 = vld [vmem:[%s389 + $0x41] sm:$0xff]
    %v411 = vld [vmem:[%s389 + $0x51] sm:$0xff]
    %v412 = vld [vmem:[%s389 + $0x61] sm:$0xff]
    %v413 = vld [vmem:[%s389 + $0x71] sm:$0xff]
    %v414 = vld [vmem:[%s389 + $0xa1] sm:$0xff]
    %v415 = vld [vmem:[%s389 + $0xb1] sm:$0xff]
    %v416 = vld [vmem:[%s389 + $0xc1] sm:$0xff]
    %v417 = vld [vmem:[%s389 + $0xd1] sm:$0xff]
    %v418 = vld [vmem:[%s389 + $0xe1] sm:$0xff]
    %v419 = vld [vmem:[%s389 + $0xf1] sm:$0xff]
    %v420 = vld [vmem:[%s389 + $0x101] sm:$0xff]
    %v421 = vld [vmem:[%s389 + $0x111] sm:$0xff]
    %v422 = vld [vmem:[%s389 + $0x2] sm:$0xff]
    %v423 = vld [vmem:[%s389 + $0x12] sm:$0xff]
    %v424 = vld [vmem:[%s389 + $0x22] sm:$0xff]
    %v425 = vld [vmem:[%s389 + $0x32] sm:$0xff]
    %v426 = vld [vmem:[%s389 + $0x42] sm:$0xff]
    %v427 = vld [vmem:[%s389 + $0x52] sm:$0xff]
    %v428 = vld [vmem:[%s389 + $0x62] sm:$0xff]
    %v429 = vld [vmem:[%s389 + $0x72] sm:$0xff]
    %v430 = vld [vmem:[%s389 + $0xa2] sm:$0xff]
    %v431 = vld [vmem:[%s389 + $0xb2] sm:$0xff]
    %v432 = vld [vmem:[%s389 + $0xc2] sm:$0xff]
    %v433 = vld [vmem:[%s389 + $0xd2] sm:$0xff]
    %v434 = vld [vmem:[%s389 + $0xe2] sm:$0xff]
    %v435 = vld [vmem:[%s389 + $0xf2] sm:$0xff]
    %v436 = vld [vmem:[%s389 + $0x102] sm:$0xff]
    %v437 = vld [vmem:[%s389 + $0x112] sm:$0xff]
    %454 = vrot.lane.b32.xlu0 %v309, 4
    %v455 = vpop.permute.xlu0 %454
    %456 = vrot.lane.b32.xlu0 %v310, 4
    %v457 = vpop.permute.xlu0 %456
    %458 = vrot.lane.b32.xlu0 %v311, 4
    %v459 = vpop.permute.xlu0 %458
    %460 = vrot.lane.b32.xlu0 %v312, 4
    %v461 = vpop.permute.xlu0 %460
    %462 = vrot.lane.b32.xlu0 %v313, 4
    %v463 = vpop.permute.xlu0 %462
    %464 = vrot.lane.b32.xlu0 %v314, 4
    %v465 = vpop.permute.xlu0 %464
    %466 = vrot.lane.b32.xlu0 %v315, 4
    %v467 = vpop.permute.xlu0 %466
    %468 = vrot.lane.b32.xlu0 %v316, 4
    %v469 = vpop.permute.xlu0 %468
    %470 = vrot.lane.b32.xlu0 %v317, 4
    %v471 = vpop.permute.xlu0 %470
    %472 = vrot.lane.b32.xlu0 %v318, 4
    %v473 = vpop.permute.xlu0 %472
    %474 = vrot.lane.b32.xlu0 %v319, 4
    %v475 = vpop.permute.xlu0 %474
    %476 = vrot.lane.b32.xlu0 %v320, 4
    %v477 = vpop.permute.xlu0 %476
    %478 = vrot.lane.b32.xlu0 %v321, 4
    %v479 = vpop.permute.xlu0 %478
    %480 = vrot.lane.b32.xlu0 %v322, 4
    %v481 = vpop.permute.xlu0 %480
    %482 = vrot.lane.b32.xlu0 %v323, 4
    %v483 = vpop.permute.xlu0 %482
    %484 = vrot.lane.b32.xlu0 %v324, 4
    %v485 = vpop.permute.xlu0 %484
    %518 = vrot.lane.b32.xlu0 %v325, 8
    %v519 = vpop.permute.xlu0 %518
    %520 = vrot.lane.b32.xlu0 %v326, 8
    %v521 = vpop.permute.xlu0 %520
    %522 = vrot.lane.b32.xlu0 %v327, 8
    %v523 = vpop.permute.xlu0 %522
    %524 = vrot.lane.b32.xlu0 %v328, 8
    %v525 = vpop.permute.xlu0 %524
    %526 = vrot.lane.b32.xlu0 %v329, 8
    %v527 = vpop.permute.xlu0 %526
    %528 = vrot.lane.b32.xlu0 %v330, 8
    %v529 = vpop.permute.xlu0 %528
    %530 = vrot.lane.b32.xlu0 %v331, 8
    %v531 = vpop.permute.xlu0 %530
    %532 = vrot.lane.b32.xlu0 %v332, 8
    %v533 = vpop.permute.xlu0 %532
    %534 = vrot.lane.b32.xlu0 %v333, 8
    %v535 = vpop.permute.xlu0 %534
    %536 = vrot.lane.b32.xlu0 %v334, 8
    %v537 = vpop.permute.xlu0 %536
    %538 = vrot.lane.b32.xlu0 %v335, 8
    %v539 = vpop.permute.xlu0 %538
    %540 = vrot.lane.b32.xlu0 %v336, 8
    %v541 = vpop.permute.xlu0 %540
    %542 = vrot.lane.b32.xlu0 %v337, 8
    %v543 = vpop.permute.xlu0 %542
    %544 = vrot.lane.b32.xlu0 %v338, 8
    %v545 = vpop.permute.xlu0 %544
    %546 = vrot.lane.b32.xlu0 %v339, 8
    %v547 = vpop.permute.xlu0 %546
    %548 = vrot.lane.b32.xlu0 %v340, 8
    %v549 = vpop.permute.xlu0 %548
    %582 = vrot.lane.b32.xlu0 %v341, 12
    %v583 = vpop.permute.xlu0 %582
    %584 = vrot.lane.b32.xlu0 %v342, 12
    %v585 = vpop.permute.xlu0 %584
    %586 = vrot.lane.b32.xlu0 %v343, 12
    %v587 = vpop.permute.xlu0 %586
    %588 = vrot.lane.b32.xlu0 %v344, 12
    %v589 = vpop.permute.xlu0 %588
    %590 = vrot.lane.b32.xlu0 %v345, 12
    %v591 = vpop.permute.xlu0 %590
    %592 = vrot.lane.b32.xlu0 %v346, 12
    %v593 = vpop.permute.xlu0 %592
    %594 = vrot.lane.b32.xlu0 %v347, 12
    %v595 = vpop.permute.xlu0 %594
    %596 = vrot.lane.b32.xlu0 %v348, 12
    %v597 = vpop.permute.xlu0 %596
    %598 = vrot.lane.b32.xlu0 %v349, 12
    %v599 = vpop.permute.xlu0 %598
    %600 = vrot.lane.b32.xlu0 %v350, 12
    %v601 = vpop.permute.xlu0 %600
    %602 = vrot.lane.b32.xlu0 %v351, 12
    %v603 = vpop.permute.xlu0 %602
    %604 = vrot.lane.b32.xlu0 %v352, 12
    %v605 = vpop.permute.xlu0 %604
    %606 = vrot.lane.b32.xlu0 %v353, 12
    %v607 = vpop.permute.xlu0 %606
    %608 = vrot.lane.b32.xlu0 %v354, 12
    %v609 = vpop.permute.xlu0 %608
    %610 = vrot.lane.b32.xlu0 %v355, 12
    %v611 = vpop.permute.xlu0 %610
    %612 = vrot.lane.b32.xlu0 %v356, 12
    %v613 = vpop.permute.xlu0 %612
    %646 = vrot.lane.b32.xlu0 %v357, 16
    %v647 = vpop.permute.xlu0 %646
    %648 = vrot.lane.b32.xlu0 %v358, 16
    %v649 = vpop.permute.xlu0 %648
    %650 = vrot.lane.b32.xlu0 %v359, 16
    %v651 = vpop.permute.xlu0 %650
    %652 = vrot.lane.b32.xlu0 %v360, 16
    %v653 = vpop.permute.xlu0 %652
    %654 = vrot.lane.b32.xlu0 %v361, 16
    %v655 = vpop.permute.xlu0 %654
    %656 = vrot.lane.b32.xlu0 %v362, 16
    %v657 = vpop.permute.xlu0 %656
    %658 = vrot.lane.b32.xlu0 %v363, 16
    %v659 = vpop.permute.xlu0 %658
    %660 = vrot.lane.b32.xlu0 %v364, 16
    %v661 = vpop.permute.xlu0 %660
    %662 = vrot.lane.b32.xlu0 %v365, 16
    %v663 = vpop.permute.xlu0 %662
    %664 = vrot.lane.b32.xlu0 %v366, 16
    %v665 = vpop.permute.xlu0 %664
    %666 = vrot.lane.b32.xlu0 %v367, 16
    %v667 = vpop.permute.xlu0 %666
    %668 = vrot.lane.b32.xlu0 %v368, 16
    %v669 = vpop.permute.xlu0 %668
    %670 = vrot.lane.b32.xlu0 %v369, 16
    %v671 = vpop.permute.xlu0 %670
    %672 = vrot.lane.b32.xlu0 %v370, 16
    %v673 = vpop.permute.xlu0 %672
    %674 = vrot.lane.b32.xlu0 %v371, 16
    %v675 = vpop.permute.xlu0 %674
    %676 = vrot.lane.b32.xlu0 %v372, 16
    %v677 = vpop.permute.xlu0 %676
    %710 = vrot.lane.b32.xlu0 %v373, 20
    %v711 = vpop.permute.xlu0 %710
    %712 = vrot.lane.b32.xlu0 %v374, 20
    %v713 = vpop.permute.xlu0 %712
    %714 = vrot.lane.b32.xlu0 %v375, 20
    %v715 = vpop.permute.xlu0 %714
    %716 = vrot.lane.b32.xlu0 %v376, 20
    %v717 = vpop.permute.xlu0 %716
    %718 = vrot.lane.b32.xlu0 %v377, 20
    %v719 = vpop.permute.xlu0 %718
    %720 = vrot.lane.b32.xlu0 %v378, 20
    %v721 = vpop.permute.xlu0 %720
    %722 = vrot.lane.b32.xlu0 %v379, 20
    %v723 = vpop.permute.xlu0 %722
    %724 = vrot.lane.b32.xlu0 %v380, 20
    %v725 = vpop.permute.xlu0 %724
    %726 = vrot.lane.b32.xlu0 %v381, 20
    %v727 = vpop.permute.xlu0 %726
    %728 = vrot.lane.b32.xlu0 %v382, 20
    %v729 = vpop.permute.xlu0 %728
    %730 = vrot.lane.b32.xlu0 %v383, 20
    %v731 = vpop.permute.xlu0 %730
    %732 = vrot.lane.b32.xlu0 %v384, 20
    %v733 = vpop.permute.xlu0 %732
    %734 = vrot.lane.b32.xlu0 %v385, 20
    %v735 = vpop.permute.xlu0 %734
    %736 = vrot.lane.b32.xlu0 %v386, 20
    %v737 = vpop.permute.xlu0 %736
    %738 = vrot.lane.b32.xlu0 %v387, 20
    %v739 = vpop.permute.xlu0 %738
    %740 = vrot.lane.b32.xlu0 %v388, 20
    %v741 = vpop.permute.xlu0 %740
    %774 = vrot.lane.b32.xlu0 %v390, 24
    %v775 = vpop.permute.xlu0 %774
    %776 = vrot.lane.b32.xlu0 %v391, 24
    %v777 = vpop.permute.xlu0 %776
    %778 = vrot.lane.b32.xlu0 %v392, 24
    %v779 = vpop.permute.xlu0 %778
    %780 = vrot.lane.b32.xlu0 %v393, 24
    %v781 = vpop.permute.xlu0 %780
    %782 = vrot.lane.b32.xlu0 %v394, 24
    %v783 = vpop.permute.xlu0 %782
    %784 = vrot.lane.b32.xlu0 %v395, 24
    %v785 = vpop.permute.xlu0 %784
    %786 = vrot.lane.b32.xlu0 %v396, 24
    %v787 = vpop.permute.xlu0 %786
    %788 = vrot.lane.b32.xlu0 %v397, 24
    %v789 = vpop.permute.xlu0 %788
    %790 = vrot.lane.b32.xlu0 %v398, 24
    %v791 = vpop.permute.xlu0 %790
    %792 = vrot.lane.b32.xlu0 %v399, 24
    %v793 = vpop.permute.xlu0 %792
    %794 = vrot.lane.b32.xlu0 %v400, 24
    %v795 = vpop.permute.xlu0 %794
    %796 = vrot.lane.b32.xlu0 %v401, 24
    %v797 = vpop.permute.xlu0 %796
    %798 = vrot.lane.b32.xlu0 %v402, 24
    %v799 = vpop.permute.xlu0 %798
    %800 = vrot.lane.b32.xlu0 %v403, 24
    %v801 = vpop.permute.xlu0 %800
    %802 = vrot.lane.b32.xlu0 %v404, 24
    %v803 = vpop.permute.xlu0 %802
    %804 = vrot.lane.b32.xlu0 %v405, 24
    %v805 = vpop.permute.xlu0 %804
    %838 = vrot.lane.b32.xlu0 %v406, 28
    %v839 = vpop.permute.xlu0 %838
    %840 = vrot.lane.b32.xlu0 %v407, 28
    %v841 = vpop.permute.xlu0 %840
    %842 = vrot.lane.b32.xlu0 %v408, 28
    %v843 = vpop.permute.xlu0 %842
    %844 = vrot.lane.b32.xlu0 %v409, 28
    %v845 = vpop.permute.xlu0 %844
    %846 = vrot.lane.b32.xlu0 %v410, 28
    %v847 = vpop.permute.xlu0 %846
    %848 = vrot.lane.b32.xlu0 %v411, 28
    %v849 = vpop.permute.xlu0 %848
    %850 = vrot.lane.b32.xlu0 %v412, 28
    %v851 = vpop.permute.xlu0 %850
    %852 = vrot.lane.b32.xlu0 %v413, 28
    %v853 = vpop.permute.xlu0 %852
    %854 = vrot.lane.b32.xlu0 %v414, 28
    %v855 = vpop.permute.xlu0 %854
    %856 = vrot.lane.b32.xlu0 %v415, 28
    %v857 = vpop.permute.xlu0 %856
    %858 = vrot.lane.b32.xlu0 %v416, 28
    %v859 = vpop.permute.xlu0 %858
    %860 = vrot.lane.b32.xlu0 %v417, 28
    %v861 = vpop.permute.xlu0 %860
    %862 = vrot.lane.b32.xlu0 %v418, 28
    %v863 = vpop.permute.xlu0 %862
    %864 = vrot.lane.b32.xlu0 %v419, 28
    %v865 = vpop.permute.xlu0 %864
    %866 = vrot.lane.b32.xlu0 %v420, 28
    %v867 = vpop.permute.xlu0 %866
    %868 = vrot.lane.b32.xlu0 %v421, 28
    %v869 = vpop.permute.xlu0 %868
    %902 = vrot.lane.b32.xlu0 %v422, 32
    %v903 = vpop.permute.xlu0 %902
    %904 = vrot.lane.b32.xlu0 %v423, 32
    %v905 = vpop.permute.xlu0 %904
    %906 = vrot.lane.b32.xlu0 %v424, 32
    %v907 = vpop.permute.xlu0 %906
    %908 = vrot.lane.b32.xlu0 %v425, 32
    %v909 = vpop.permute.xlu0 %908
    %910 = vrot.lane.b32.xlu0 %v426, 32
    %v911 = vpop.permute.xlu0 %910
    %912 = vrot.lane.b32.xlu0 %v427, 32
    %v913 = vpop.permute.xlu0 %912
    %914 = vrot.lane.b32.xlu0 %v428, 32
    %v915 = vpop.permute.xlu0 %914
    %916 = vrot.lane.b32.xlu0 %v429, 32
    %v917 = vpop.permute.xlu0 %916
    %918 = vrot.lane.b32.xlu0 %v430, 32
    %v919 = vpop.permute.xlu0 %918
    %920 = vrot.lane.b32.xlu0 %v431, 32
    %v921 = vpop.permute.xlu0 %920
    %922 = vrot.lane.b32.xlu0 %v432, 32
    %v923 = vpop.permute.xlu0 %922
    %924 = vrot.lane.b32.xlu0 %v433, 32
    %v925 = vpop.permute.xlu0 %924
    %926 = vrot.lane.b32.xlu0 %v434, 32
    %v927 = vpop.permute.xlu0 %926
    %928 = vrot.lane.b32.xlu0 %v435, 32
    %v929 = vpop.permute.xlu0 %928
    %930 = vrot.lane.b32.xlu0 %v436, 32
    %v931 = vpop.permute.xlu0 %930
    %932 = vrot.lane.b32.xlu0 %v437, 32
    %v933 = vpop.permute.xlu0 %932
    %v950 = vsel %vm186, %v293, %v455
    %v951 = vsel %vm186, %v294, %v457
    %v952 = vsel %vm186, %v295, %v459
    %v953 = vsel %vm186, %v296, %v461
    %v954 = vsel %vm186, %v297, %v463
    %v955 = vsel %vm186, %v298, %v465
    %v956 = vsel %vm186, %v299, %v467
    %v957 = vsel %vm186, %v300, %v469
    %v958 = vsel %vm186, %v301, %v471
    %v959 = vsel %vm186, %v302, %v473
    %v960 = vsel %vm186, %v303, %v475
    %v961 = vsel %vm186, %v304, %v477
    %v962 = vsel %vm186, %v305, %v479
    %v963 = vsel %vm186, %v306, %v481
    %v964 = vsel %vm186, %v307, %v483
    %v965 = vsel %vm186, %v308, %v485
    %vm966 = vcmask 64512
    %v967 = vsel %vm966, %v950, %v519
    %v968 = vsel %vm966, %v951, %v521
    %v969 = vsel %vm966, %v952, %v523
    %v970 = vsel %vm966, %v953, %v525
    %v971 = vsel %vm966, %v954, %v527
    %v972 = vsel %vm966, %v955, %v529
    %v973 = vsel %vm966, %v956, %v531
    %v974 = vsel %vm966, %v957, %v533
    %v975 = vsel %vm966, %v958, %v535
    %v976 = vsel %vm966, %v959, %v537
    %v977 = vsel %vm966, %v960, %v539
    %v978 = vsel %vm966, %v961, %v541
    %v979 = vsel %vm966, %v962, %v543
    %v980 = vsel %vm966, %v963, %v545
    %v981 = vsel %vm966, %v964, %v547
    %v982 = vsel %vm966, %v965, %v549
    %vm983 = vcmask 97280
    %v984 = vsel %vm983, %v967, %v583
    %v985 = vsel %vm983, %v968, %v585
    %v986 = vsel %vm983, %v969, %v587
    %v987 = vsel %vm983, %v970, %v589
    %v988 = vsel %vm983, %v971, %v591
    %v989 = vsel %vm983, %v972, %v593
    %v990 = vsel %vm983, %v973, %v595
    %v991 = vsel %vm983, %v974, %v597
    %v992 = vsel %vm983, %v975, %v599
    %v993 = vsel %vm983, %v976, %v601
    %v994 = vsel %vm983, %v977, %v603
    %v995 = vsel %vm983, %v978, %v605
    %v996 = vsel %vm983, %v979, %v607
    %v997 = vsel %vm983, %v980, %v609
    %v998 = vsel %vm983, %v981, %v611
    %v999 = vsel %vm983, %v982, %v613
    %vm1000 = vcmask 130048
    %v1001 = vsel %vm1000, %v984, %v647
    %v1002 = vsel %vm1000, %v985, %v649
    %v1003 = vsel %vm1000, %v986, %v651
    %v1004 = vsel %vm1000, %v987, %v653
    %v1005 = vsel %vm1000, %v988, %v655
    %v1006 = vsel %vm1000, %v989, %v657
    %v1007 = vsel %vm1000, %v990, %v659
    %v1008 = vsel %vm1000, %v991, %v661
    %v1009 = vsel %vm1000, %v992, %v663
    %v1010 = vsel %vm1000, %v993, %v665
    %v1011 = vsel %vm1000, %v994, %v667
    %v1012 = vsel %vm1000, %v995, %v669
    %v1013 = vsel %vm1000, %v996, %v671
    %v1014 = vsel %vm1000, %v997, %v673
    %v1015 = vsel %vm1000, %v998, %v675
    %v1016 = vsel %vm1000, %v999, %v677
    %vm1017 = vcmask 162816
    %v1018 = vsel %vm1017, %v1001, %v711
    %v1019 = vsel %vm1017, %v1002, %v713
    %v1020 = vsel %vm1017, %v1003, %v715
    %v1021 = vsel %vm1017, %v1004, %v717
    %v1022 = vsel %vm1017, %v1005, %v719
    %v1023 = vsel %vm1017, %v1006, %v721
    %v1024 = vsel %vm1017, %v1007, %v723
    %v1025 = vsel %vm1017, %v1008, %v725
    %v1026 = vsel %vm1017, %v1009, %v727
    %v1027 = vsel %vm1017, %v1010, %v729
    %v1028 = vsel %vm1017, %v1011, %v731
    %v1029 = vsel %vm1017, %v1012, %v733
    %v1030 = vsel %vm1017, %v1013, %v735
    %v1031 = vsel %vm1017, %v1014, %v737
    %v1032 = vsel %vm1017, %v1015, %v739
    %v1033 = vsel %vm1017, %v1016, %v741
    %vm1034 = vcmask 195584
    %v1035 = vsel %vm1034, %v1018, %v775
    %v1036 = vsel %vm1034, %v1019, %v777
    %v1037 = vsel %vm1034, %v1020, %v779
    %v1038 = vsel %vm1034, %v1021, %v781
    %v1039 = vsel %vm1034, %v1022, %v783
    %v1040 = vsel %vm1034, %v1023, %v785
    %v1041 = vsel %vm1034, %v1024, %v787
    %v1042 = vsel %vm1034, %v1025, %v789
    %v1043 = vsel %vm1034, %v1026, %v791
    %v1044 = vsel %vm1034, %v1027, %v793
    %v1045 = vsel %vm1034, %v1028, %v795
    %v1046 = vsel %vm1034, %v1029, %v797
    %v1047 = vsel %vm1034, %v1030, %v799
    %v1048 = vsel %vm1034, %v1031, %v801
    %v1049 = vsel %vm1034, %v1032, %v803
    %v1050 = vsel %vm1034, %v1033, %v805
    %vm1051 = vcmask 228352
    %v1052 = vsel %vm1051, %v1035, %v839
    %v1053 = vsel %vm1051, %v1036, %v841
    %v1054 = vsel %vm1051, %v1037, %v843
    %v1055 = vsel %vm1051, %v1038, %v845
    %v1056 = vsel %vm1051, %v1039, %v847
    %v1057 = vsel %vm1051, %v1040, %v849
    %v1058 = vsel %vm1051, %v1041, %v851
    %v1059 = vsel %vm1051, %v1042, %v853
    %v1060 = vsel %vm1051, %v1043, %v855
    %v1061 = vsel %vm1051, %v1044, %v857
    %v1062 = vsel %vm1051, %v1045, %v859
    %v1063 = vsel %vm1051, %v1046, %v861
    %v1064 = vsel %vm1051, %v1047, %v863
    %v1065 = vsel %vm1051, %v1048, %v865
    %v1066 = vsel %vm1051, %v1049, %v867
    %v1067 = vsel %vm1051, %v1050, %v869
    %vm1068 = vcmask 261120
    %v1069 = vsel %vm1068, %v1052, %v903
    %v1070 = vsel %vm1068, %v1053, %v905
    %v1071 = vsel %vm1068, %v1054, %v907
    %v1072 = vsel %vm1068, %v1055, %v909
    %v1073 = vsel %vm1068, %v1056, %v911
    %v1074 = vsel %vm1068, %v1057, %v913
    %v1075 = vsel %vm1068, %v1058, %v915
    %v1076 = vsel %vm1068, %v1059, %v917
    %v1077 = vsel %vm1068, %v1060, %v919
    %v1078 = vsel %vm1068, %v1061, %v921
    %v1079 = vsel %vm1068, %v1062, %v923
    %v1080 = vsel %vm1068, %v1063, %v925
    %v1081 = vsel %vm1068, %v1064, %v927
    %v1082 = vsel %vm1068, %v1065, %v929
    %v1083 = vsel %vm1068, %v1066, %v931
    %v1084 = vsel %vm1068, %v1067, %v933
    %v1085 = vld [vmem:[%s1] sm:$0xff]
    %vm1086 = vcmask 293888
    %v1088 = vsel %vm1086, %v1085, 0
    %v1091 = vsel %vm1086, %v1069, 0
    %v1094 = vsel %vm1086, %v1070, 0
    %v1097 = vsel %vm1086, %v1071, 0
    %v1100 = vsel %vm1086, %v1072, 0
    %v1103 = vsel %vm1086, %v1073, 0
    %v1106 = vsel %vm1086, %v1074, 0
    %v1109 = vsel %vm1086, %v1075, 0
    %v1112 = vsel %vm1086, %v1076, 0
    %v1115 = vsel %vm1086, %v1077, 0
    %v1118 = vsel %vm1086, %v1078, 0
    %v1121 = vsel %vm1086, %v1079, 0
    %v1124 = vsel %vm1086, %v1080, 0
    %v1127 = vsel %vm1086, %v1081, 0
    %v1130 = vsel %vm1086, %v1082, 0
    %v1133 = vsel %vm1086, %v1083, 0
    %v1136 = vsel %vm1086, %v1084, 0
    %1138 = vmatprep.subr.mxu0 0.0
    %1139 = vmatpush1.xpose.msra.mxu0 %v1091
    %1140 = vmatprep.subr.mxu0 0.0
    %1141 = vmatpush1.xpose.msra.mxu0 %v1094
    %1142 = vmatprep.subr.mxu0 0.0
    %1143 = vmatpush1.xpose.msra.mxu0 %v1097
    %1144 = vmatprep.subr.mxu0 0.0
    %1145 = vmatpush1.xpose.msra.mxu0 %v1100
    %1146 = vmatprep.subr.mxu0 0.0
    %1147 = vmatpush1.xpose.msra.mxu0 %v1103
    %1148 = vmatprep.subr.mxu0 0.0
    %1149 = vmatpush1.xpose.msra.mxu0 %v1106
    %1150 = vmatprep.subr.mxu0 0.0
    %1151 = vmatpush1.xpose.msra.mxu0 %v1109
    %1152 = vmatprep.subr.mxu0 0.0
    %1153 = vmatpush1.xpose.msra.mxu0 %v1112
    %1154 = vmatprep.subr.mxu0 0.0
    %1155 = vmatpush1.xpose.msra.mxu0 %v1115
    %1156 = vmatprep.subr.mxu0 0.0
    %1157 = vmatpush1.xpose.msra.mxu0 %v1118
    %1158 = vmatprep.subr.mxu0 0.0
    %1159 = vmatpush1.xpose.msra.mxu0 %v1121
    %1160 = vmatprep.subr.mxu0 0.0
    %1161 = vmatpush1.xpose.msra.mxu0 %v1124
    %1162 = vmatprep.subr.mxu0 0.0
    %1163 = vmatpush1.xpose.msra.mxu0 %v1127
    %1164 = vmatprep.subr.mxu0 0.0
    %1165 = vmatpush1.xpose.msra.mxu0 %v1130
    %1166 = vmatprep.subr.mxu0 0.0
    %1167 = vmatpush1.xpose.msra.mxu0 %v1133
    %1168 = vmatprep.subr.mxu0 0.0
    %1169 = vmatpush1.xpose.msra.mxu0 %v1136
    %1170 = vmatprep.subr.mxu0 0.0
    %1171 = vmatpush1.xpose.msra.mxu0 0.0
    %1172 = vmatprep.subr.mxu0 0.0
    %1173 = vmatpush1.xpose.msra.mxu0 0.0
    %1174 = vmatprep.subr.mxu0 0.0
    %1175 = vmatpush1.xpose.msra.mxu0 0.0
    %1176 = vmatprep.subr.mxu0 0.0
    %1177 = vmatpush1.xpose.msra.mxu0 0.0
    %1178 = vmatprep.subr.mxu0 0.0
    %1179 = vmatpush1.xpose.msra.mxu0 0.0
    %1180 = vmatprep.subr.mxu0 0.0
    %1181 = vmatpush1.xpose.msra.mxu0 0.0
    %1182 = vmatprep.subr.mxu0 0.0
    %1183 = vmatpush1.xpose.msra.mxu0 0.0
    %1184 = vmatprep.subr.mxu0 0.0
    %1185 = vmatpush1.xpose.msra.mxu0 0.0
    %1186 = vmatprep.subr.mxu0 0.0
    %1187 = vmatpush1.xpose.msra.mxu0 0.0
    %1188 = vmatprep.subr.mxu0 0.0
    %1189 = vmatpush1.xpose.msra.mxu0 0.0
    %1190 = vmatprep.subr.mxu0 0.0
    %1191 = vmatpush1.xpose.msra.mxu0 0.0
    %1192 = vmatprep.subr.mxu0 0.0
    %1193 = vmatpush1.xpose.msra.mxu0 0.0
    %1194 = vmatprep.subr.mxu0 0.0
    %1195 = vmatpush1.xpose.msra.mxu0 0.0
    %1196 = vmatprep.subr.mxu0 0.0
    %1197 = vmatpush1.xpose.msra.mxu0 0.0
    %1198 = vmatprep.subr.mxu0 0.0
    %1199 = vmatpush1.xpose.msra.mxu0 0.0
    %1200 = vmatprep.subr.mxu0 0.0
    %1201 = vmatpush1.xpose.msra.mxu0 0.0
    %1202 = vmatprep.mubr.f32.mxu0 0.0
    %1203 = vmatmul.mubr.f32.gmra.mrb[0].mxu0 %v1088
    %v1204 = vpop.f32.mrb[0].mxu0
    %v1205 = vadd.f32 0.0, %v1204
    %v1206 = vpop.f32.mrb[0].mxu0
    %1207 = vdwg.mxu0
    %1208 = vadd.xlane.f32.xlu0 %v1205
    %v1209 = vpop.xlane.xlu0 %1208
    %v1210 = vmul.f32 %v1209, 0.0078125
    %v1211 = vsub.f32 %v1205, %v1210
    %v1212 = vmul.f32 %v1211, %v1211
    %1213 = vadd.xlane.f32.xlu0 %v1212
    %v1214 = vpop.xlane.xlu0 %1213
    %v1215 = vmul.f32 %v1214, 0.0078125
    %v1216 = vadd.f32 %v1215, 1e-05
    %v1217 = vrsqrt.pop %v1216
    %v1218 = vmul.f32 %v1211, %v1217
    %v1219 = vld [vmem:[%s2] sm:$0xff]
    %1221 = vset.pattern.permute.xlu0 0
    %1222 = vperm.xlu0 %1221, %v1219
    %v1223 = vpop.permute.xlu0 %1222
    %v1225 = vmul.f32 %v1218, %v1223
    %v1226 = vld [vmem:[%s3] sm:$0xff]
    %1228 = vset.pattern.permute.xlu0 0
    %1229 = vperm.xlu0 %1228, %v1226
    %v1230 = vpop.permute.xlu0 %1229
    %v1232 = vadd.f32 %v1225, %v1230
    %vm1233 = vcmp.ge.f32.partialorder %v1232, 0.0
    %v1234 = vmul.f32 %v1232, 0.2
    %v1235 = vsel %vm1233, %v1232, %v1234
    %1236 = vxpose.xlu0.b32.start [1/16] %v1235, 128
    %1237 = vxpose.xlu0.b32.cont [2/16] 0.0, 128
    %1238 = vxpose.xlu0.b32.cont [3/16] 0.0, 128
    %1239 = vxpose.xlu0.b32.cont [4/16] 0.0, 128
    %1240 = vxpose.xlu0.b32.cont [5/16] 0.0, 128
    %1241 = vxpose.xlu0.b32.cont [6/16] 0.0, 128
    %1242 = vxpose.xlu0.b32.cont [7/16] 0.0, 128
    %1243 = vxpose.xlu0.b32.cont [8/16] 0.0, 128
    %1244 = vxpose.xlu0.b32.cont [9/16] 0.0, 128
    %1245 = vxpose.xlu0.b32.cont [10/16] 0.0, 128
    %1246 = vxpose.xlu0.b32.cont [11/16] 0.0, 128
    %1247 = vxpose.xlu0.b32.cont [12/16] 0.0, 128
    %1248 = vxpose.xlu0.b32.cont [13/16] 0.0, 128
    %1249 = vxpose.xlu0.b32.cont [14/16] 0.0, 128
    %1250 = vxpose.xlu0.b32.cont [15/16] 0.0, 128
    %1251 = vxpose.xlu0.b32.end [16/16] 0.0, 128
    %v1252 = vpop.trf.xlu0
    %v1253 = vpop.trf.xlu0
    %v1254 = vpop.trf.xlu0
    %v1255 = vpop.trf.xlu0
    %v1256 = vpop.trf.xlu0
    %v1257 = vpop.trf.xlu0
    %v1258 = vpop.trf.xlu0
    %v1259 = vpop.trf.xlu0
    %v1260 = vpop.trf.xlu0
    %v1261 = vpop.trf.xlu0
    %v1262 = vpop.trf.xlu0
    %v1263 = vpop.trf.xlu0
    %v1264 = vpop.trf.xlu0
    %v1265 = vpop.trf.xlu0
    %v1266 = vpop.trf.xlu0
    %v1267 = vpop.trf.xlu0
    %1268 = vst.msk [vmem:[#allocation3] sm:$0xff] %vm966, 0.0
    %vm1269 = vcmask 58368
    %1270 = vst.msk [vmem:[#allocation3 + $0x8] sm:$0x3] %vm1269, 0.0
    %1271 = vst.msk [vmem:[#allocation3 + $0x10] sm:$0xff] %vm966, 0.0
    %1272 = vst.msk [vmem:[#allocation3 + $0x18] sm:$0x3] %vm1269, 0.0
    %1273 = vst.msk [vmem:[#allocation3 + $0x20] sm:$0xff] %vm966, 0.0
    %1274 = vst.msk [vmem:[#allocation3 + $0x28] sm:$0x3] %vm1269, 0.0
    %1275 = vst.msk [vmem:[#allocation3 + $0x30] sm:$0xff] %vm966, 0.0
    %1276 = vst.msk [vmem:[#allocation3 + $0x38] sm:$0x3] %vm1269, 0.0
    %1277 = vst.msk [vmem:[#allocation3 + $0x40] sm:$0xff] %vm966, 0.0
    %1278 = vst.msk [vmem:[#allocation3 + $0x48] sm:$0x3] %vm1269, 0.0
    %1279 = vst.msk [vmem:[#allocation3 + $0x50] sm:$0xff] %vm966, 0.0
    %1280 = vst.msk [vmem:[#allocation3 + $0x58] sm:$0x3] %vm1269, 0.0
    %1281 = vst.msk [vmem:[#allocation3 + $0x60] sm:$0xff] %vm966, 0.0
    %1282 = vst.msk [vmem:[#allocation3 + $0x68] sm:$0x3] %vm1269, 0.0
    %1283 = vst.msk [vmem:[#allocation3 + $0x70] sm:$0xff] %vm966, 0.0
    %1284 = vst.msk [vmem:[#allocation3 + $0x78] sm:$0x3] %vm1269, 0.0
    %1285 = vst.msk [vmem:[#allocation3 + $0x80] sm:$0xff] %vm966, 0.0
    %1286 = vst.msk [vmem:[#allocation3 + $0x88] sm:$0x3] %vm1269, 0.0
    %1287 = vst.msk [vmem:[#allocation3 + $0x90] sm:$0xff] %vm966, 0.0
    %1288 = vst.msk [vmem:[#allocation3 + $0x98] sm:$0x3] %vm1269, 0.0
    %1289 = vst.msk [vmem:[#allocation3 + $0xa0] sm:$0xff] %vm966, 0.0
    %1290 = vst.msk [vmem:[#allocation3 + $0xa8] sm:$0x3] %vm1269, 0.0
    %1291 = vst.msk [vmem:[#allocation3 + $0xb0] sm:$0xff] %vm966, 0.0
    %1292 = vst.msk [vmem:[#allocation3 + $0xb8] sm:$0x3] %vm1269, 0.0
    %1293 = vst.msk [vmem:[#allocation3 + $0xc0] sm:$0xff] %vm966, 0.0
    %1294 = vst.msk [vmem:[#allocation3 + $0xc8] sm:$0x3] %vm1269, 0.0
    %1295 = vst.msk [vmem:[#allocation3 + $0xd0] sm:$0xff] %vm966, 0.0
    %1296 = vst.msk [vmem:[#allocation3 + $0xd8] sm:$0x3] %vm1269, 0.0
    %1297 = vst.msk [vmem:[#allocation3 + $0xe0] sm:$0xff] %vm966, 0.0
    %1298 = vst.msk [vmem:[#allocation3 + $0xe8] sm:$0x3] %vm1269, 0.0
    %1299 = vst.msk [vmem:[#allocation3 + $0xf0] sm:$0xff] %vm966, 0.0
    %1300 = vst.msk [vmem:[#allocation3 + $0xf8] sm:$0x3] %vm1269, 0.0
    %1301 = vst.msk [vmem:[#allocation3 + $0x100] sm:$0xff] %vm966, 0.0
    %1302 = vst.msk [vmem:[#allocation3 + $0x108] sm:$0x3] %vm1269, 0.0
    %1303 = vst.msk [vmem:[#allocation3 + $0x110] sm:$0xff] %vm966, 0.0
    %1304 = vst.msk [vmem:[#allocation3 + $0x118] sm:$0x3] %vm1269, 0.0
    %1305 = vst.msk [vmem:[#allocation3 + $0x120] sm:$0xff] %vm966, 0.0
    %1306 = vst.msk [vmem:[#allocation3 + $0x128] sm:$0x3] %vm1269, 0.0
    %1307 = vst.msk [vmem:[#allocation3 + $0x130] sm:$0xff] %vm966, 0.0
    %1308 = vst.msk [vmem:[#allocation3 + $0x138] sm:$0x3] %vm1269, 0.0
    %s1309 = scalar_lea.vmem [#allocation3], 16
    %1310 = vst.msk [vmem:[%s1309 + $0x1] sm:$0xff] %vm966, %v1252
    %1311 = vst.msk [vmem:[%s1309 + $0x11] sm:$0xff] %vm966, %v1253
    %1312 = vst.msk [vmem:[%s1309 + $0x21] sm:$0xff] %vm966, %v1254
    %1313 = vst.msk [vmem:[%s1309 + $0x31] sm:$0xff] %vm966, %v1255
    %1314 = vst.msk [vmem:[%s1309 + $0x41] sm:$0xff] %vm966, %v1256
    %1315 = vst.msk [vmem:[%s1309 + $0x51] sm:$0xff] %vm966, %v1257
    %1316 = vst.msk [vmem:[%s1309 + $0x61] sm:$0xff] %vm966, %v1258
    %1317 = vst.msk [vmem:[%s1309 + $0x71] sm:$0xff] %vm966, %v1259
    %1318 = vst.msk [vmem:[%s1309 + $0xa1] sm:$0xff] %vm966, %v1260
    %1319 = vst.msk [vmem:[%s1309 + $0xb1] sm:$0xff] %vm966, %v1261
    %1320 = vst.msk [vmem:[%s1309 + $0xc1] sm:$0xff] %vm966, %v1262
    %1321 = vst.msk [vmem:[%s1309 + $0xd1] sm:$0xff] %vm966, %v1263
    %1322 = vst.msk [vmem:[%s1309 + $0xe1] sm:$0xff] %vm966, %v1264
    %1323 = vst.msk [vmem:[%s1309 + $0xf1] sm:$0xff] %vm966, %v1265
    %1324 = vst.msk [vmem:[%s1309 + $0x101] sm:$0xff] %vm966, %v1266
    %1325 = vst.msk [vmem:[%s1309 + $0x111] sm:$0xff] %vm966, %v1267
    %v1326 = vld [vmem:[#allocation3] sm:$0xff]
    %v1327 = vld [vmem:[#allocation3 + $0x10] sm:$0xff]
    %v1328 = vld [vmem:[#allocation3 + $0x20] sm:$0xff]
    %v1329 = vld [vmem:[#allocation3 + $0x30] sm:$0xff]
    %v1330 = vld [vmem:[#allocation3 + $0x40] sm:$0xff]
    %v1331 = vld [vmem:[#allocation3 + $0x50] sm:$0xff]
    %v1332 = vld [vmem:[#allocation3 + $0x60] sm:$0xff]
    %v1333 = vld [vmem:[#allocation3 + $0x70] sm:$0xff]
    %v1334 = vld [vmem:[#allocation3 + $0xa0] sm:$0xff]
    %v1335 = vld [vmem:[#allocation3 + $0xb0] sm:$0xff]
    %v1336 = vld [vmem:[#allocation3 + $0xc0] sm:$0xff]
    %v1337 = vld [vmem:[#allocation3 + $0xd0] sm:$0xff]
    %v1338 = vld [vmem:[#allocation3 + $0xe0] sm:$0xff]
    %v1339 = vld [vmem:[#allocation3 + $0xf0] sm:$0xff]
    %v1340 = vld [vmem:[#allocation3 + $0x100] sm:$0xff]
    %v1341 = vld [vmem:[#allocation3 + $0x110] sm:$0xff]
    %v1342 = vld [vmem:[#allocation3 + $0x1] sm:$0xff]
    %v1343 = vld [vmem:[#allocation3 + $0x11] sm:$0xff]
    %v1344 = vld [vmem:[#allocation3 + $0x21] sm:$0xff]
    %v1345 = vld [vmem:[#allocation3 + $0x31] sm:$0xff]
    %v1346 = vld [vmem:[#allocation3 + $0x41] sm:$0xff]
    %v1347 = vld [vmem:[#allocation3 + $0x51] sm:$0xff]
    %v1348 = vld [vmem:[#allocation3 + $0x61] sm:$0xff]
    %v1349 = vld [vmem:[#allocation3 + $0x71] sm:$0xff]
    %v1350 = vld [vmem:[#allocation3 + $0xa1] sm:$0xff]
    %v1351 = vld [vmem:[#allocation3 + $0xb1] sm:$0xff]
    %v1352 = vld [vmem:[#allocation3 + $0xc1] sm:$0xff]
    %v1353 = vld [vmem:[#allocation3 + $0xd1] sm:$0xff]
    %v1354 = vld [vmem:[#allocation3 + $0xe1] sm:$0xff]
    %v1355 = vld [vmem:[#allocation3 + $0xf1] sm:$0xff]
    %v1356 = vld [vmem:[#allocation3 + $0x101] sm:$0xff]
    %v1357 = vld [vmem:[#allocation3 + $0x111] sm:$0xff]
    %v1358 = vld [vmem:[#allocation3 + $0x2] sm:$0xff]
    %v1359 = vld [vmem:[#allocation3 + $0x12] sm:$0xff]
    %v1360 = vld [vmem:[#allocation3 + $0x22] sm:$0xff]
    %v1361 = vld [vmem:[#allocation3 + $0x32] sm:$0xff]
    %v1362 = vld [vmem:[#allocation3 + $0x42] sm:$0xff]
    %v1363 = vld [vmem:[#allocation3 + $0x52] sm:$0xff]
    %v1364 = vld [vmem:[#allocation3 + $0x62] sm:$0xff]
    %v1365 = vld [vmem:[#allocation3 + $0x72] sm:$0xff]
    %v1366 = vld [vmem:[#allocation3 + $0xa2] sm:$0xff]
    %v1367 = vld [vmem:[#allocation3 + $0xb2] sm:$0xff]
    %v1368 = vld [vmem:[#allocation3 + $0xc2] sm:$0xff]
    %v1369 = vld [vmem:[#allocation3 + $0xd2] sm:$0xff]
    %v1370 = vld [vmem:[#allocation3 + $0xe2] sm:$0xff]
    %v1371 = vld [vmem:[#allocation3 + $0xf2] sm:$0xff]
    %v1372 = vld [vmem:[#allocation3 + $0x102] sm:$0xff]
    %v1373 = vld [vmem:[#allocation3 + $0x112] sm:$0xff]
    %v1374 = vld [vmem:[%s1309] sm:$0xff]
    %v1375 = vld [vmem:[%s1309 + $0x10] sm:$0xff]
    %v1376 = vld [vmem:[%s1309 + $0x20] sm:$0xff]
    %v1377 = vld [vmem:[%s1309 + $0x30] sm:$0xff]
    %v1378 = vld [vmem:[%s1309 + $0x40] sm:$0xff]
    %v1379 = vld [vmem:[%s1309 + $0x50] sm:$0xff]
    %v1380 = vld [vmem:[%s1309 + $0x60] sm:$0xff]
    %v1381 = vld [vmem:[%s1309 + $0x70] sm:$0xff]
    %v1382 = vld [vmem:[%s1309 + $0xa0] sm:$0xff]
    %v1383 = vld [vmem:[%s1309 + $0xb0] sm:$0xff]
    %v1384 = vld [vmem:[%s1309 + $0xc0] sm:$0xff]
    %v1385 = vld [vmem:[%s1309 + $0xd0] sm:$0xff]
    %v1386 = vld [vmem:[%s1309 + $0xe0] sm:$0xff]
    %v1387 = vld [vmem:[%s1309 + $0xf0] sm:$0xff]
    %v1388 = vld [vmem:[%s1309 + $0x100] sm:$0xff]
    %v1389 = vld [vmem:[%s1309 + $0x110] sm:$0xff]
    %v1390 = vld [vmem:[%s1309 + $0x1] sm:$0xff]
    %v1391 = vld [vmem:[%s1309 + $0x11] sm:$0xff]
    %v1392 = vld [vmem:[%s1309 + $0x21] sm:$0xff]
    %v1393 = vld [vmem:[%s1309 + $0x31] sm:$0xff]
    %v1394 = vld [vmem:[%s1309 + $0x41] sm:$0xff]
    %v1395 = vld [vmem:[%s1309 + $0x51] sm:$0xff]
    %v1396 = vld [vmem:[%s1309 + $0x61] sm:$0xff]
    %v1397 = vld [vmem:[%s1309 + $0x71] sm:$0xff]
    %v1398 = vld [vmem:[%s1309 + $0xa1] sm:$0xff]
    %v1399 = vld [vmem:[%s1309 + $0xb1] sm:$0xff]
    %v1400 = vld [vmem:[%s1309 + $0xc1] sm:$0xff]
    %v1401 = vld [vmem:[%s1309 + $0xd1] sm:$0xff]
    %v1402 = vld [vmem:[%s1309 + $0xe1] sm:$0xff]
    %v1403 = vld [vmem:[%s1309 + $0xf1] sm:$0xff]
    %v1404 = vld [vmem:[%s1309 + $0x101] sm:$0xff]
    %v1405 = vld [vmem:[%s1309 + $0x111] sm:$0xff]
    %v1406 = vld [vmem:[%s1309 + $0x2] sm:$0xff]
    %v1407 = vld [vmem:[%s1309 + $0x12] sm:$0xff]
    %v1408 = vld [vmem:[%s1309 + $0x22] sm:$0xff]
    %v1409 = vld [vmem:[%s1309 + $0x32] sm:$0xff]
    %v1410 = vld [vmem:[%s1309 + $0x42] sm:$0xff]
    %v1411 = vld [vmem:[%s1309 + $0x52] sm:$0xff]
    %v1412 = vld [vmem:[%s1309 + $0x62] sm:$0xff]
    %v1413 = vld [vmem:[%s1309 + $0x72] sm:$0xff]
    %v1414 = vld [vmem:[%s1309 + $0xa2] sm:$0xff]
    %v1415 = vld [vmem:[%s1309 + $0xb2] sm:$0xff]
    %v1416 = vld [vmem:[%s1309 + $0xc2] sm:$0xff]
    %v1417 = vld [vmem:[%s1309 + $0xd2] sm:$0xff]
    %v1418 = vld [vmem:[%s1309 + $0xe2] sm:$0xff]
    %v1419 = vld [vmem:[%s1309 + $0xf2] sm:$0xff]
    %v1420 = vld [vmem:[%s1309 + $0x102] sm:$0xff]
    %v1421 = vld [vmem:[%s1309 + $0x112] sm:$0xff]
    %s1422 = scalar_lea.vmem [#allocation3], 32
    %v1423 = vld [vmem:[%s1422] sm:$0xff]
    %v1424 = vld [vmem:[%s1422 + $0x10] sm:$0xff]
    %v1425 = vld [vmem:[%s1422 + $0x20] sm:$0xff]
    %v1426 = vld [vmem:[%s1422 + $0x30] sm:$0xff]
    %v1427 = vld [vmem:[%s1422 + $0x40] sm:$0xff]
    %v1428 = vld [vmem:[%s1422 + $0x50] sm:$0xff]
    %v1429 = vld [vmem:[%s1422 + $0x60] sm:$0xff]
    %v1430 = vld [vmem:[%s1422 + $0x70] sm:$0xff]
    %v1431 = vld [vmem:[%s1422 + $0xa0] sm:$0xff]
    %v1432 = vld [vmem:[%s1422 + $0xb0] sm:$0xff]
    %v1433 = vld [vmem:[%s1422 + $0xc0] sm:$0xff]
    %v1434 = vld [vmem:[%s1422 + $0xd0] sm:$0xff]
    %v1435 = vld [vmem:[%s1422 + $0xe0] sm:$0xff]
    %v1436 = vld [vmem:[%s1422 + $0xf0] sm:$0xff]
    %v1437 = vld [vmem:[%s1422 + $0x100] sm:$0xff]
    %v1438 = vld [vmem:[%s1422 + $0x110] sm:$0xff]
    %v1439 = vld [vmem:[%s1422 + $0x1] sm:$0xff]
    %v1440 = vld [vmem:[%s1422 + $0x11] sm:$0xff]
    %v1441 = vld [vmem:[%s1422 + $0x21] sm:$0xff]
    %v1442 = vld [vmem:[%s1422 + $0x31] sm:$0xff]
    %v1443 = vld [vmem:[%s1422 + $0x41] sm:$0xff]
    %v1444 = vld [vmem:[%s1422 + $0x51] sm:$0xff]
    %v1445 = vld [vmem:[%s1422 + $0x61] sm:$0xff]
    %v1446 = vld [vmem:[%s1422 + $0x71] sm:$0xff]
    %v1447 = vld [vmem:[%s1422 + $0xa1] sm:$0xff]
    %v1448 = vld [vmem:[%s1422 + $0xb1] sm:$0xff]
    %v1449 = vld [vmem:[%s1422 + $0xc1] sm:$0xff]
    %v1450 = vld [vmem:[%s1422 + $0xd1] sm:$0xff]
    %v1451 = vld [vmem:[%s1422 + $0xe1] sm:$0xff]
    %v1452 = vld [vmem:[%s1422 + $0xf1] sm:$0xff]
    %v1453 = vld [vmem:[%s1422 + $0x101] sm:$0xff]
    %v1454 = vld [vmem:[%s1422 + $0x111] sm:$0xff]
    %v1455 = vld [vmem:[%s1422 + $0x2] sm:$0xff]
    %v1456 = vld [vmem:[%s1422 + $0x12] sm:$0xff]
    %v1457 = vld [vmem:[%s1422 + $0x22] sm:$0xff]
    %v1458 = vld [vmem:[%s1422 + $0x32] sm:$0xff]
    %v1459 = vld [vmem:[%s1422 + $0x42] sm:$0xff]
    %v1460 = vld [vmem:[%s1422 + $0x52] sm:$0xff]
    %v1461 = vld [vmem:[%s1422 + $0x62] sm:$0xff]
    %v1462 = vld [vmem:[%s1422 + $0x72] sm:$0xff]
    %v1463 = vld [vmem:[%s1422 + $0xa2] sm:$0xff]
    %v1464 = vld [vmem:[%s1422 + $0xb2] sm:$0xff]
    %v1465 = vld [vmem:[%s1422 + $0xc2] sm:$0xff]
    %v1466 = vld [vmem:[%s1422 + $0xd2] sm:$0xff]
    %v1467 = vld [vmem:[%s1422 + $0xe2] sm:$0xff]
    %v1468 = vld [vmem:[%s1422 + $0xf2] sm:$0xff]
    %v1469 = vld [vmem:[%s1422 + $0x102] sm:$0xff]
    %v1470 = vld [vmem:[%s1422 + $0x112] sm:$0xff]
    %1487 = vrot.lane.b32.xlu0 %v1342, 8
    %v1488 = vpop.permute.xlu0 %1487
    %1489 = vrot.lane.b32.xlu0 %v1343, 8
    %v1490 = vpop.permute.xlu0 %1489
    %1491 = vrot.lane.b32.xlu0 %v1344, 8
    %v1492 = vpop.permute.xlu0 %1491
    %1493 = vrot.lane.b32.xlu0 %v1345, 8
    %v1494 = vpop.permute.xlu0 %1493
    %1495 = vrot.lane.b32.xlu0 %v1346, 8
    %v1496 = vpop.permute.xlu0 %1495
    %1497 = vrot.lane.b32.xlu0 %v1347, 8
    %v1498 = vpop.permute.xlu0 %1497
    %1499 = vrot.lane.b32.xlu0 %v1348, 8
    %v1500 = vpop.permute.xlu0 %1499
    %1501 = vrot.lane.b32.xlu0 %v1349, 8
    %v1502 = vpop.permute.xlu0 %1501
    %1503 = vrot.lane.b32.xlu0 %v1350, 8
    %v1504 = vpop.permute.xlu0 %1503
    %1505 = vrot.lane.b32.xlu0 %v1351, 8
    %v1506 = vpop.permute.xlu0 %1505
    %1507 = vrot.lane.b32.xlu0 %v1352, 8
    %v1508 = vpop.permute.xlu0 %1507
    %1509 = vrot.lane.b32.xlu0 %v1353, 8
    %v1510 = vpop.permute.xlu0 %1509
    %1511 = vrot.lane.b32.xlu0 %v1354, 8
    %v1512 = vpop.permute.xlu0 %1511
    %1513 = vrot.lane.b32.xlu0 %v1355, 8
    %v1514 = vpop.permute.xlu0 %1513
    %1515 = vrot.lane.b32.xlu0 %v1356, 8
    %v1516 = vpop.permute.xlu0 %1515
    %1517 = vrot.lane.b32.xlu0 %v1357, 8
    %v1518 = vpop.permute.xlu0 %1517
    %1551 = vrot.lane.b32.xlu0 %v1358, 16
    %v1552 = vpop.permute.xlu0 %1551
    %1553 = vrot.lane.b32.xlu0 %v1359, 16
    %v1554 = vpop.permute.xlu0 %1553
    %1555 = vrot.lane.b32.xlu0 %v1360, 16
    %v1556 = vpop.permute.xlu0 %1555
    %1557 = vrot.lane.b32.xlu0 %v1361, 16
    %v1558 = vpop.permute.xlu0 %1557
    %1559 = vrot.lane.b32.xlu0 %v1362, 16
    %v1560 = vpop.permute.xlu0 %1559
    %1561 = vrot.lane.b32.xlu0 %v1363, 16
    %v1562 = vpop.permute.xlu0 %1561
    %1563 = vrot.lane.b32.xlu0 %v1364, 16
    %v1564 = vpop.permute.xlu0 %1563
    %1565 = vrot.lane.b32.xlu0 %v1365, 16
    %v1566 = vpop.permute.xlu0 %1565
    %1567 = vrot.lane.b32.xlu0 %v1366, 16
    %v1568 = vpop.permute.xlu0 %1567
    %1569 = vrot.lane.b32.xlu0 %v1367, 16
    %v1570 = vpop.permute.xlu0 %1569
    %1571 = vrot.lane.b32.xlu0 %v1368, 16
    %v1572 = vpop.permute.xlu0 %1571
    %1573 = vrot.lane.b32.xlu0 %v1369, 16
    %v1574 = vpop.permute.xlu0 %1573
    %1575 = vrot.lane.b32.xlu0 %v1370, 16
    %v1576 = vpop.permute.xlu0 %1575
    %1577 = vrot.lane.b32.xlu0 %v1371, 16
    %v1578 = vpop.permute.xlu0 %1577
    %1579 = vrot.lane.b32.xlu0 %v1372, 16
    %v1580 = vpop.permute.xlu0 %1579
    %1581 = vrot.lane.b32.xlu0 %v1373, 16
    %v1582 = vpop.permute.xlu0 %1581
    %1615 = vrot.lane.b32.xlu0 %v1374, 24
    %v1616 = vpop.permute.xlu0 %1615
    %1617 = vrot.lane.b32.xlu0 %v1375, 24
    %v1618 = vpop.permute.xlu0 %1617
    %1619 = vrot.lane.b32.xlu0 %v1376, 24
    %v1620 = vpop.permute.xlu0 %1619
    %1621 = vrot.lane.b32.xlu0 %v1377, 24
    %v1622 = vpop.permute.xlu0 %1621
    %1623 = vrot.lane.b32.xlu0 %v1378, 24
    %v1624 = vpop.permute.xlu0 %1623
    %1625 = vrot.lane.b32.xlu0 %v1379, 24
    %v1626 = vpop.permute.xlu0 %1625
    %1627 = vrot.lane.b32.xlu0 %v1380, 24
    %v1628 = vpop.permute.xlu0 %1627
    %1629 = vrot.lane.b32.xlu0 %v1381, 24
    %v1630 = vpop.permute.xlu0 %1629
    %1631 = vrot.lane.b32.xlu0 %v1382, 24
    %v1632 = vpop.permute.xlu0 %1631
    %1633 = vrot.lane.b32.xlu0 %v1383, 24
    %v1634 = vpop.permute.xlu0 %1633
    %1635 = vrot.lane.b32.xlu0 %v1384, 24
    %v1636 = vpop.permute.xlu0 %1635
    %1637 = vrot.lane.b32.xlu0 %v1385, 24
    %v1638 = vpop.permute.xlu0 %1637
    %1639 = vrot.lane.b32.xlu0 %v1386, 24
    %v1640 = vpop.permute.xlu0 %1639
    %1641 = vrot.lane.b32.xlu0 %v1387, 24
    %v1642 = vpop.permute.xlu0 %1641
    %1643 = vrot.lane.b32.xlu0 %v1388, 24
    %v1644 = vpop.permute.xlu0 %1643
    %1645 = vrot.lane.b32.xlu0 %v1389, 24
    %v1646 = vpop.permute.xlu0 %1645
    %1679 = vrot.lane.b32.xlu0 %v1390, 32
    %v1680 = vpop.permute.xlu0 %1679
    %1681 = vrot.lane.b32.xlu0 %v1391, 32
    %v1682 = vpop.permute.xlu0 %1681
    %1683 = vrot.lane.b32.xlu0 %v1392, 32
    %v1684 = vpop.permute.xlu0 %1683
    %1685 = vrot.lane.b32.xlu0 %v1393, 32
    %v1686 = vpop.permute.xlu0 %1685
    %1687 = vrot.lane.b32.xlu0 %v1394, 32
    %v1688 = vpop.permute.xlu0 %1687
    %1689 = vrot.lane.b32.xlu0 %v1395, 32
    %v1690 = vpop.permute.xlu0 %1689
    %1691 = vrot.lane.b32.xlu0 %v1396, 32
    %v1692 = vpop.permute.xlu0 %1691
    %1693 = vrot.lane.b32.xlu0 %v1397, 32
    %v1694 = vpop.permute.xlu0 %1693
    %1695 = vrot.lane.b32.xlu0 %v1398, 32
    %v1696 = vpop.permute.xlu0 %1695
    %1697 = vrot.lane.b32.xlu0 %v1399, 32
    %v1698 = vpop.permute.xlu0 %1697
    %1699 = vrot.lane.b32.xlu0 %v1400, 32
    %v1700 = vpop.permute.xlu0 %1699
    %1701 = vrot.lane.b32.xlu0 %v1401, 32
    %v1702 = vpop.permute.xlu0 %1701
    %1703 = vrot.lane.b32.xlu0 %v1402, 32
    %v1704 = vpop.permute.xlu0 %1703
    %1705 = vrot.lane.b32.xlu0 %v1403, 32
    %v1706 = vpop.permute.xlu0 %1705
    %1707 = vrot.lane.b32.xlu0 %v1404, 32
    %v1708 = vpop.permute.xlu0 %1707
    %1709 = vrot.lane.b32.xlu0 %v1405, 32
    %v1710 = vpop.permute.xlu0 %1709
    %1743 = vrot.lane.b32.xlu0 %v1406, 40
    %v1744 = vpop.permute.xlu0 %1743
    %1745 = vrot.lane.b32.xlu0 %v1407, 40
    %v1746 = vpop.permute.xlu0 %1745
    %1747 = vrot.lane.b32.xlu0 %v1408, 40
    %v1748 = vpop.permute.xlu0 %1747
    %1749 = vrot.lane.b32.xlu0 %v1409, 40
    %v1750 = vpop.permute.xlu0 %1749
    %1751 = vrot.lane.b32.xlu0 %v1410, 40
    %v1752 = vpop.permute.xlu0 %1751
    %1753 = vrot.lane.b32.xlu0 %v1411, 40
    %v1754 = vpop.permute.xlu0 %1753
    %1755 = vrot.lane.b32.xlu0 %v1412, 40
    %v1756 = vpop.permute.xlu0 %1755
    %1757 = vrot.lane.b32.xlu0 %v1413, 40
    %v1758 = vpop.permute.xlu0 %1757
    %1759 = vrot.lane.b32.xlu0 %v1414, 40
    %v1760 = vpop.permute.xlu0 %1759
    %1761 = vrot.lane.b32.xlu0 %v1415, 40
    %v1762 = vpop.permute.xlu0 %1761
    %1763 = vrot.lane.b32.xlu0 %v1416, 40
    %v1764 = vpop.permute.xlu0 %1763
    %1765 = vrot.lane.b32.xlu0 %v1417, 40
    %v1766 = vpop.permute.xlu0 %1765
    %1767 = vrot.lane.b32.xlu0 %v1418, 40
    %v1768 = vpop.permute.xlu0 %1767
    %1769 = vrot.lane.b32.xlu0 %v1419, 40
    %v1770 = vpop.permute.xlu0 %1769
    %1771 = vrot.lane.b32.xlu0 %v1420, 40
    %v1772 = vpop.permute.xlu0 %1771
    %1773 = vrot.lane.b32.xlu0 %v1421, 40
    %v1774 = vpop.permute.xlu0 %1773
    %1807 = vrot.lane.b32.xlu0 %v1423, 48
    %v1808 = vpop.permute.xlu0 %1807
    %1809 = vrot.lane.b32.xlu0 %v1424, 48
    %v1810 = vpop.permute.xlu0 %1809
    %1811 = vrot.lane.b32.xlu0 %v1425, 48
    %v1812 = vpop.permute.xlu0 %1811
    %1813 = vrot.lane.b32.xlu0 %v1426, 48
    %v1814 = vpop.permute.xlu0 %1813
    %1815 = vrot.lane.b32.xlu0 %v1427, 48
    %v1816 = vpop.permute.xlu0 %1815
    %1817 = vrot.lane.b32.xlu0 %v1428, 48
    %v1818 = vpop.permute.xlu0 %1817
    %1819 = vrot.lane.b32.xlu0 %v1429, 48
    %v1820 = vpop.permute.xlu0 %1819
    %1821 = vrot.lane.b32.xlu0 %v1430, 48
    %v1822 = vpop.permute.xlu0 %1821
    %1823 = vrot.lane.b32.xlu0 %v1431, 48
    %v1824 = vpop.permute.xlu0 %1823
    %1825 = vrot.lane.b32.xlu0 %v1432, 48
    %v1826 = vpop.permute.xlu0 %1825
    %1827 = vrot.lane.b32.xlu0 %v1433, 48
    %v1828 = vpop.permute.xlu0 %1827
    %1829 = vrot.lane.b32.xlu0 %v1434, 48
    %v1830 = vpop.permute.xlu0 %1829
    %1831 = vrot.lane.b32.xlu0 %v1435, 48
    %v1832 = vpop.permute.xlu0 %1831
    %1833 = vrot.lane.b32.xlu0 %v1436, 48
    %v1834 = vpop.permute.xlu0 %1833
    %1835 = vrot.lane.b32.xlu0 %v1437, 48
    %v1836 = vpop.permute.xlu0 %1835
    %1837 = vrot.lane.b32.xlu0 %v1438, 48
    %v1838 = vpop.permute.xlu0 %1837
    %1871 = vrot.lane.b32.xlu0 %v1439, 56
    %v1872 = vpop.permute.xlu0 %1871
    %1873 = vrot.lane.b32.xlu0 %v1440, 56
    %v1874 = vpop.permute.xlu0 %1873
    %1875 = vrot.lane.b32.xlu0 %v1441, 56
    %v1876 = vpop.permute.xlu0 %1875
    %1877 = vrot.lane.b32.xlu0 %v1442, 56
    %v1878 = vpop.permute.xlu0 %1877
    %1879 = vrot.lane.b32.xlu0 %v1443, 56
    %v1880 = vpop.permute.xlu0 %1879
    %1881 = vrot.lane.b32.xlu0 %v1444, 56
    %v1882 = vpop.permute.xlu0 %1881
    %1883 = vrot.lane.b32.xlu0 %v1445, 56
    %v1884 = vpop.permute.xlu0 %1883
    %1885 = vrot.lane.b32.xlu0 %v1446, 56
    %v1886 = vpop.permute.xlu0 %1885
    %1887 = vrot.lane.b32.xlu0 %v1447, 56
    %v1888 = vpop.permute.xlu0 %1887
    %1889 = vrot.lane.b32.xlu0 %v1448, 56
    %v1890 = vpop.permute.xlu0 %1889
    %1891 = vrot.lane.b32.xlu0 %v1449, 56
    %v1892 = vpop.permute.xlu0 %1891
    %1893 = vrot.lane.b32.xlu0 %v1450, 56
    %v1894 = vpop.permute.xlu0 %1893
    %1895 = vrot.lane.b32.xlu0 %v1451, 56
    %v1896 = vpop.permute.xlu0 %1895
    %1897 = vrot.lane.b32.xlu0 %v1452, 56
    %v1898 = vpop.permute.xlu0 %1897
    %1899 = vrot.lane.b32.xlu0 %v1453, 56
    %v1900 = vpop.permute.xlu0 %1899
    %1901 = vrot.lane.b32.xlu0 %v1454, 56
    %v1902 = vpop.permute.xlu0 %1901
    %1935 = vrot.lane.b32.xlu0 %v1455, 64
    %v1936 = vpop.permute.xlu0 %1935
    %1937 = vrot.lane.b32.xlu0 %v1456, 64
    %v1938 = vpop.permute.xlu0 %1937
    %1939 = vrot.lane.b32.xlu0 %v1457, 64
    %v1940 = vpop.permute.xlu0 %1939
    %1941 = vrot.lane.b32.xlu0 %v1458, 64
    %v1942 = vpop.permute.xlu0 %1941
    %1943 = vrot.lane.b32.xlu0 %v1459, 64
    %v1944 = vpop.permute.xlu0 %1943
    %1945 = vrot.lane.b32.xlu0 %v1460, 64
    %v1946 = vpop.permute.xlu0 %1945
    %1947 = vrot.lane.b32.xlu0 %v1461, 64
    %v1948 = vpop.permute.xlu0 %1947
    %1949 = vrot.lane.b32.xlu0 %v1462, 64
    %v1950 = vpop.permute.xlu0 %1949
    %1951 = vrot.lane.b32.xlu0 %v1463, 64
    %v1952 = vpop.permute.xlu0 %1951
    %1953 = vrot.lane.b32.xlu0 %v1464, 64
    %v1954 = vpop.permute.xlu0 %1953
    %1955 = vrot.lane.b32.xlu0 %v1465, 64
    %v1956 = vpop.permute.xlu0 %1955
    %1957 = vrot.lane.b32.xlu0 %v1466, 64
    %v1958 = vpop.permute.xlu0 %1957
    %1959 = vrot.lane.b32.xlu0 %v1467, 64
    %v1960 = vpop.permute.xlu0 %1959
    %1961 = vrot.lane.b32.xlu0 %v1468, 64
    %v1962 = vpop.permute.xlu0 %1961
    %1963 = vrot.lane.b32.xlu0 %v1469, 64
    %v1964 = vpop.permute.xlu0 %1963
    %1965 = vrot.lane.b32.xlu0 %v1470, 64
    %v1966 = vpop.permute.xlu0 %1965
    %v1983 = vsel %vm966, %v1326, %v1488
    %v1984 = vsel %vm966, %v1327, %v1490
    %v1985 = vsel %vm966, %v1328, %v1492
    %v1986 = vsel %vm966, %v1329, %v1494
    %v1987 = vsel %vm966, %v1330, %v1496
    %v1988 = vsel %vm966, %v1331, %v1498
    %v1989 = vsel %vm966, %v1332, %v1500
    %v1990 = vsel %vm966, %v1333, %v1502
    %v1991 = vsel %vm966, %v1334, %v1504
    %v1992 = vsel %vm966, %v1335, %v1506
    %v1993 = vsel %vm966, %v1336, %v1508
    %v1994 = vsel %vm966, %v1337, %v1510
    %v1995 = vsel %vm966, %v1338, %v1512
    %v1996 = vsel %vm966, %v1339, %v1514
    %v1997 = vsel %vm966, %v1340, %v1516
    %v1998 = vsel %vm966, %v1341, %v1518
    %v1999 = vsel %vm1000, %v1983, %v1552
    %v2000 = vsel %vm1000, %v1984, %v1554
    %v2001 = vsel %vm1000, %v1985, %v1556
    %v2002 = vsel %vm1000, %v1986, %v1558
    %v2003 = vsel %vm1000, %v1987, %v1560
    %v2004 = vsel %vm1000, %v1988, %v1562
    %v2005 = vsel %vm1000, %v1989, %v1564
    %v2006 = vsel %vm1000, %v1990, %v1566
    %v2007 = vsel %vm1000, %v1991, %v1568
    %v2008 = vsel %vm1000, %v1992, %v1570
    %v2009 = vsel %vm1000, %v1993, %v1572
    %v2010 = vsel %vm1000, %v1994, %v1574
    %v2011 = vsel %vm1000, %v1995, %v1576
    %v2012 = vsel %vm1000, %v1996, %v1578
    %v2013 = vsel %vm1000, %v1997, %v1580
    %v2014 = vsel %vm1000, %v1998, %v1582
    %v2015 = vsel %vm1034, %v1999, %v1616
    %v2016 = vsel %vm1034, %v2000, %v1618
    %v2017 = vsel %vm1034, %v2001, %v1620
    %v2018 = vsel %vm1034, %v2002, %v1622
    %v2019 = vsel %vm1034, %v2003, %v1624
    %v2020 = vsel %vm1034, %v2004, %v1626
    %v2021 = vsel %vm1034, %v2005, %v1628
    %v2022 = vsel %vm1034, %v2006, %v1630
    %v2023 = vsel %vm1034, %v2007, %v1632
    %v2024 = vsel %vm1034, %v2008, %v1634
    %v2025 = vsel %vm1034, %v2009, %v1636
    %v2026 = vsel %vm1034, %v2010, %v1638
    %v2027 = vsel %vm1034, %v2011, %v1640
    %v2028 = vsel %vm1034, %v2012, %v1642
    %v2029 = vsel %vm1034, %v2013, %v1644
    %v2030 = vsel %vm1034, %v2014, %v1646
    %v2031 = vsel %vm1068, %v2015, %v1680
    %v2032 = vsel %vm1068, %v2016, %v1682
    %v2033 = vsel %vm1068, %v2017, %v1684
    %v2034 = vsel %vm1068, %v2018, %v1686
    %v2035 = vsel %vm1068, %v2019, %v1688
    %v2036 = vsel %vm1068, %v2020, %v1690
    %v2037 = vsel %vm1068, %v2021, %v1692
    %v2038 = vsel %vm1068, %v2022, %v1694
    %v2039 = vsel %vm1068, %v2023, %v1696
    %v2040 = vsel %vm1068, %v2024, %v1698
    %v2041 = vsel %vm1068, %v2025, %v1700
    %v2042 = vsel %vm1068, %v2026, %v1702
    %v2043 = vsel %vm1068, %v2027, %v1704
    %v2044 = vsel %vm1068, %v2028, %v1706
    %v2045 = vsel %vm1068, %v2029, %v1708
    %v2046 = vsel %vm1068, %v2030, %v1710
    %vm2047 = vcmask 326656
    %v2048 = vsel %vm2047, %v2031, %v1744
    %v2049 = vsel %vm2047, %v2032, %v1746
    %v2050 = vsel %vm2047, %v2033, %v1748
    %v2051 = vsel %vm2047, %v2034, %v1750
    %v2052 = vsel %vm2047, %v2035, %v1752
    %v2053 = vsel %vm2047, %v2036, %v1754
    %v2054 = vsel %vm2047, %v2037, %v1756
    %v2055 = vsel %vm2047, %v2038, %v1758
    %v2056 = vsel %vm2047, %v2039, %v1760
    %v2057 = vsel %vm2047, %v2040, %v1762
    %v2058 = vsel %vm2047, %v2041, %v1764
    %v2059 = vsel %vm2047, %v2042, %v1766
    %v2060 = vsel %vm2047, %v2043, %v1768
    %v2061 = vsel %vm2047, %v2044, %v1770
    %v2062 = vsel %vm2047, %v2045, %v1772
    %v2063 = vsel %vm2047, %v2046, %v1774
    %vm2064 = vcmask 392192
    %v2065 = vsel %vm2064, %v2048, %v1808
    %v2066 = vsel %vm2064, %v2049, %v1810
    %v2067 = vsel %vm2064, %v2050, %v1812
    %v2068 = vsel %vm2064, %v2051, %v1814
    %v2069 = vsel %vm2064, %v2052, %v1816
    %v2070 = vsel %vm2064, %v2053, %v1818
    %v2071 = vsel %vm2064, %v2054, %v1820
    %v2072 = vsel %vm2064, %v2055, %v1822
    %v2073 = vsel %vm2064, %v2056, %v1824
    %v2074 = vsel %vm2064, %v2057, %v1826
    %v2075 = vsel %vm2064, %v2058, %v1828
    %v2076 = vsel %vm2064, %v2059, %v1830
    %v2077 = vsel %vm2064, %v2060, %v1832
    %v2078 = vsel %vm2064, %v2061, %v1834
    %v2079 = vsel %vm2064, %v2062, %v1836
    %v2080 = vsel %vm2064, %v2063, %v1838
    %vm2081 = vcmask 457728
    %v2082 = vsel %vm2081, %v2065, %v1872
    %v2083 = vsel %vm2081, %v2066, %v1874
    %v2084 = vsel %vm2081, %v2067, %v1876
    %v2085 = vsel %vm2081, %v2068, %v1878
    %v2086 = vsel %vm2081, %v2069, %v1880
    %v2087 = vsel %vm2081, %v2070, %v1882
    %v2088 = vsel %vm2081, %v2071, %v1884
    %v2089 = vsel %vm2081, %v2072, %v1886
    %v2090 = vsel %vm2081, %v2073, %v1888
    %v2091 = vsel %vm2081, %v2074, %v1890
    %v2092 = vsel %vm2081, %v2075, %v1892
    %v2093 = vsel %vm2081, %v2076, %v1894
    %v2094 = vsel %vm2081, %v2077, %v1896
    %v2095 = vsel %vm2081, %v2078, %v1898
    %v2096 = vsel %vm2081, %v2079, %v1900
    %v2097 = vsel %vm2081, %v2080, %v1902
    %vm2098 = vcmask 523264
    %v2099 = vsel %vm2098, %v2082, %v1936
    %v2100 = vsel %vm2098, %v2083, %v1938
    %v2101 = vsel %vm2098, %v2084, %v1940
    %v2102 = vsel %vm2098, %v2085, %v1942
    %v2103 = vsel %vm2098, %v2086, %v1944
    %v2104 = vsel %vm2098, %v2087, %v1946
    %v2105 = vsel %vm2098, %v2088, %v1948
    %v2106 = vsel %vm2098, %v2089, %v1950
    %v2107 = vsel %vm2098, %v2090, %v1952
    %v2108 = vsel %vm2098, %v2091, %v1954
    %v2109 = vsel %vm2098, %v2092, %v1956
    %v2110 = vsel %vm2098, %v2093, %v1958
    %v2111 = vsel %vm2098, %v2094, %v1960
    %v2112 = vsel %vm2098, %v2095, %v1962
    %v2113 = vsel %vm2098, %v2096, %v1964
    %v2114 = vsel %vm2098, %v2097, %v1966
    %v2115 = vld [vmem:[%s4] sm:$0xff]
    %vm2116 = vcmask 588800
    %v2118 = vsel %vm2116, %v2115, 0
    %v2121 = vsel %vm2116, %v2099, 0
    %v2124 = vsel %vm2116, %v2100, 0
    %v2127 = vsel %vm2116, %v2101, 0
    %v2130 = vsel %vm2116, %v2102, 0
    %v2133 = vsel %vm2116, %v2103, 0
    %v2136 = vsel %vm2116, %v2104, 0
    %v2139 = vsel %vm2116, %v2105, 0
    %v2142 = vsel %vm2116, %v2106, 0
    %v2145 = vsel %vm2116, %v2107, 0
    %v2148 = vsel %vm2116, %v2108, 0
    %v2151 = vsel %vm2116, %v2109, 0
    %v2154 = vsel %vm2116, %v2110, 0
    %v2157 = vsel %vm2116, %v2111, 0
    %v2160 = vsel %vm2116, %v2112, 0
    %v2163 = vsel %vm2116, %v2113, 0
    %v2166 = vsel %vm2116, %v2114, 0
    %2168 = vmatprep.subr.mxu0 0.0
    %2169 = vmatpush1.xpose.msra.mxu0 %v2121
    %2170 = vmatprep.subr.mxu0 0.0
    %2171 = vmatpush1.xpose.msra.mxu0 %v2124
    %2172 = vmatprep.subr.mxu0 0.0
    %2173 = vmatpush1.xpose.msra.mxu0 %v2127
    %2174 = vmatprep.subr.mxu0 0.0
    %2175 = vmatpush1.xpose.msra.mxu0 %v2130
    %2176 = vmatprep.subr.mxu0 0.0
    %2177 = vmatpush1.xpose.msra.mxu0 %v2133
    %2178 = vmatprep.subr.mxu0 0.0
    %2179 = vmatpush1.xpose.msra.mxu0 %v2136
    %2180 = vmatprep.subr.mxu0 0.0
    %2181 = vmatpush1.xpose.msra.mxu0 %v2139
    %2182 = vmatprep.subr.mxu0 0.0
    %2183 = vmatpush1.xpose.msra.mxu0 %v2142
    %2184 = vmatprep.subr.mxu0 0.0
    %2185 = vmatpush1.xpose.msra.mxu0 %v2145
    %2186 = vmatprep.subr.mxu0 0.0
    %2187 = vmatpush1.xpose.msra.mxu0 %v2148
    %2188 = vmatprep.subr.mxu0 0.0
    %2189 = vmatpush1.xpose.msra.mxu0 %v2151
    %2190 = vmatprep.subr.mxu0 0.0
    %2191 = vmatpush1.xpose.msra.mxu0 %v2154
    %2192 = vmatprep.subr.mxu0 0.0
    %2193 = vmatpush1.xpose.msra.mxu0 %v2157
    %2194 = vmatprep.subr.mxu0 0.0
    %2195 = vmatpush1.xpose.msra.mxu0 %v2160
    %2196 = vmatprep.subr.mxu0 0.0
    %2197 = vmatpush1.xpose.msra.mxu0 %v2163
    %2198 = vmatprep.subr.mxu0 0.0
    %2199 = vmatpush1.xpose.msra.mxu0 %v2166
    %2200 = vmatprep.subr.mxu0 0.0
    %2201 = vmatpush1.xpose.msra.mxu0 0.0
    %2202 = vmatprep.subr.mxu0 0.0
    %2203 = vmatpush1.xpose.msra.mxu0 0.0
    %2204 = vmatprep.subr.mxu0 0.0
    %2205 = vmatpush1.xpose.msra.mxu0 0.0
    %2206 = vmatprep.subr.mxu0 0.0
    %2207 = vmatpush1.xpose.msra.mxu0 0.0
    %2208 = vmatprep.subr.mxu0 0.0
    %2209 = vmatpush1.xpose.msra.mxu0 0.0
    %2210 = vmatprep.subr.mxu0 0.0
    %2211 = vmatpush1.xpose.msra.mxu0 0.0
    %2212 = vmatprep.subr.mxu0 0.0
    %2213 = vmatpush1.xpose.msra.mxu0 0.0
    %2214 = vmatprep.subr.mxu0 0.0
    %2215 = vmatpush1.xpose.msra.mxu0 0.0
    %2216 = vmatprep.subr.mxu0 0.0
    %2217 = vmatpush1.xpose.msra.mxu0 0.0
    %2218 = vmatprep.subr.mxu0 0.0
    %2219 = vmatpush1.xpose.msra.mxu0 0.0
    %2220 = vmatprep.subr.mxu0 0.0
    %2221 = vmatpush1.xpose.msra.mxu0 0.0
    %2222 = vmatprep.subr.mxu0 0.0
    %2223 = vmatpush1.xpose.msra.mxu0 0.0
    %2224 = vmatprep.subr.mxu0 0.0
    %2225 = vmatpush1.xpose.msra.mxu0 0.0
    %2226 = vmatprep.subr.mxu0 0.0
    %2227 = vmatpush1.xpose.msra.mxu0 0.0
    %2228 = vmatprep.subr.mxu0 0.0
    %2229 = vmatpush1.xpose.msra.mxu0 0.0
    %2230 = vmatprep.subr.mxu0 0.0
    %2231 = vmatpush1.xpose.msra.mxu0 0.0
    %2232 = vmatprep.mubr.f32.mxu0 0.0
    %2233 = vmatmul.mubr.f32.gmra.mrb[0].mxu0 %v2118
    %v2234 = vpop.f32.mrb[0].mxu0
    %v2235 = vadd.f32 0.0, %v2234
    %v2236 = vpop.f32.mrb[0].mxu0
    %2237 = vdwg.mxu0
    %2238 = vadd.xlane.f32.xlu0 %v2235
    %v2239 = vpop.xlane.xlu0 %2238
    %v2240 = vmul.f32 %v2239, 0.0078125
    %v2241 = vsub.f32 %v2235, %v2240
    %v2242 = vmul.f32 %v2241, %v2241
    %2243 = vadd.xlane.f32.xlu0 %v2242
    %v2244 = vpop.xlane.xlu0 %2243
    %v2245 = vmul.f32 %v2244, 0.0078125
    %v2246 = vadd.f32 %v2245, 1e-05
    %v2247 = vrsqrt.pop %v2246
    %v2248 = vmul.f32 %v2241, %v2247
    %v2249 = vld [vmem:[%s5] sm:$0xff]
    %2251 = vset.pattern.permute.xlu0 0
    %2252 = vperm.xlu0 %2251, %v2249
    %v2253 = vpop.permute.xlu0 %2252
    %v2255 = vmul.f32 %v2248, %v2253
    %v2256 = vld [vmem:[%s6] sm:$0xff]
    %2258 = vset.pattern.permute.xlu0 0
    %2259 = vperm.xlu0 %2258, %v2256
    %v2260 = vpop.permute.xlu0 %2259
    %v2262 = vadd.f32 %v2255, %v2260
    %vm2263 = vcmp.ge.f32.partialorder %v2262, 0.0
    %v2264 = vmul.f32 %v2262, 0.2
    %v2265 = vsel %vm2263, %v2262, %v2264
    %2266 = vst [vmem:[#allocation4] sm:$0xff] %v2265
    // Predicated region
    $region30: #{tpu_custom_call.1} parent=1 // pred_check
      _
    $region31: #{tpu_custom_call.1} parent=1 // pred_check_branch
      %2268 = sbr.rel (0) target = $region33
    $region32: #{tpu_custom_call.1} parent=1 // pred_region
      %s2270 = ssub.s32 128, 128
      %2271 = vsyncadd [#allocation5], %s2270
      %s2273 = sshll.u32 [#allocation4], 4
      %s2274 = int_to_ptr.vmem [resolvable:$true] %s2273
      %2276 = dma.vmem_to_hbm [thread:$0]  %s2274, 128, %s7, [#allocation5]
    $region33: #{tpu_custom_call.1} parent=1 // pred_fallthru
      _
    // Predicated region
    $region34: #{tpu_custom_call.1} parent=1 // pred_check
      _
    $region35: #{tpu_custom_call.1} parent=1 // pred_check_branch
      %2278 = sbr.rel (0) target = $region37
    $region36: #{tpu_custom_call.1} parent=1 // pred_region
      %2279 = dma.done [#allocation5], 128
    $region37: #{tpu_custom_call.1} parent=1 // pred_fallthru
      _
    %2280 = vsyncpa [#allocation5], 1

</llo_original>
